<compile_context>
chip_gen: v7x
topology: tpu7x:2x2x1
jax: 0.10.0
libtpu: 0.0.40
codegen_flags: <defaults>
</compile_context>

<pallas_src>
import jax
import jax.numpy as jnp
from jax import lax
from jax.experimental import pallas as pl
from jax.experimental.pallas import tpu as pltpu

INPUT_SIZE = 1
HIDDEN = 100
OUTPUT_SIZE = 1
HP = 128          # hidden padded to one vreg lane-width
SEQ_LEN = 8

# torch gate order in nn.LSTM weights is [i, f, g, o]; kernel layout is [i, f, o, g]
# so the three "sigmoid" gates are one contiguous (1, 3*HP) slice.
GATE_SRC_ORDER = (0, 1, 3, 2)


def lstm_kernel(x_ref, wih_ref, whh_ref, b_ref, wout_ref, bout_ref,
                out_ref, gx_scr):
    """Full LSTM recurrence + linear head for one sequence, fused in-kernel."""
    L = x_ref.shape[0]
    Hp = wout_ref.shape[1]                      # 128

    # --- hoisted input projection (INPUT_SIZE == 1): VPU broadcast ---
    # (L, 1) * (1, 4*HP) + (1, 4*HP) -> (L, 4*HP); no MXU, no big W_ih operand.
    # wih_row / bias arrive pre-scaled by 0.5 on the i/f/o gate lanes.
    gx_scr[...] = x_ref[...] * wih_ref[...] + b_ref[...]            # (L, 4*HP)

    h0 = jnp.zeros((1, Hp), jnp.float32)
    c0 = jnp.zeros((1, Hp), jnp.float32)

    def step(t, carry):
        h, c = carry
        # serial chain: one M=1 bf16 matmul + ONE tanh pass over all 4 gates.
        # Pre-activations are pre-scaled by 0.5 for i/f/o, so
        # sigmoid(x) = 0.5 + 0.5*tanh(x/2) needs only this single tanh.
        z = (jnp.dot(h.astype(jnp.bfloat16), whh_ref[...],
                     preferred_element_type=jnp.float32)
             + gx_scr[pl.ds(t, 1), :])                              # (1, 4*HP)
        tz = jnp.tanh(z)
        ifo = 0.5 + 0.5 * tz[:, :3 * Hp]                            # i | f | o
        i = ifo[:, 0 * Hp:1 * Hp]
        f = ifo[:, 1 * Hp:2 * Hp]
        o = ifo[:, 2 * Hp:3 * Hp]
        g = tz[:, 3 * Hp:]
        c_new = f * c + i * g
        h_new = o * jnp.tanh(c_new)
        return (h_new, c_new)

    h, _ = lax.fori_loop(0, L, step, (h0, c0), unroll=True)

    # --- linear head: VPU multiply + XLU lane reduce; lane-dense output ---
    out_ref[...] = (jnp.sum(h * wout_ref[...], axis=-1, keepdims=True)
                    + bout_ref[...])                                # (1, HP)


def lstm_network_forward(seq, params):
    """Pallas equivalent of LSTMnetwork.forward(seq) -> pred[-1] (shape (1,))."""
    w_ih, w_hh, b_ih, b_hh, w_lin, b_lin = params
    L = seq.shape[0]

    # sigmoid(x) = 0.5 + 0.5*tanh(x/2): fold the 0.5 pre-scale for the i/f/o
    # gates into the weights/bias here (off the serial chain entirely).
    scale = jnp.concatenate([jnp.full((3 * HP,), 0.5, jnp.float32),
                             jnp.ones((HP,), jnp.float32)])[None, :]  # (1, 4*HP)

    # x: (L,) -> (L, 1); the kernel lane-broadcasts it against the wih row.
    x_p = seq.reshape(L, 1).astype(jnp.float32)

    def pad_gates_T(w, rows_pad):
        # w: (4*HIDDEN, in_dim) -> transposed, gate-blockwise padded (rows_pad, 4*HP)
        in_dim = w.shape[1]
        out = jnp.zeros((rows_pad, 4 * HP), jnp.float32)
        for dst, src in enumerate(GATE_SRC_ORDER):
            blk = w[src * HIDDEN:(src + 1) * HIDDEN, :].T             # (in_dim, HIDDEN)
            out = out.at[:in_dim, dst * HP:dst * HP + HIDDEN].set(blk)
        return out

    # W_ih^T has a single non-zero row (INPUT_SIZE == 1): keep just that row.
    wih_row = pad_gates_T(w_ih.astype(jnp.float32), 1) * scale        # (1, 4*HP) f32
    # Recurrent weights: pre-scaled then bf16 (scale is a power of two -> exact).
    whh_p = (pad_gates_T(w_hh.astype(jnp.float32), HP)
             * scale).astype(jnp.bfloat16)                            # (HP, 4*HP) bf16

    b = (b_ih + b_hh).astype(jnp.float32)                             # (4*HIDDEN,)
    b_p = jnp.zeros((1, 4 * HP), jnp.float32)
    for dst, src in enumerate(GATE_SRC_ORDER):
        b_p = b_p.at[0, dst * HP:dst * HP + HIDDEN].set(
            b[src * HIDDEN:(src + 1) * HIDDEN])
    b_p = b_p * scale

    wout_p = jnp.zeros((1, HP), jnp.float32).at[0, :HIDDEN].set(
        w_lin.reshape(HIDDEN).astype(jnp.float32))                    # (1, HP)
    bout_p = jnp.broadcast_to(
        b_lin.reshape(1, 1).astype(jnp.float32), (1, HP))             # (1, HP)

    cost = pl.CostEstimate(
        flops=L * 2 * HP * (4 * HP)            # 8 recurrent (1,128)@(128,512) matmuls
              + L * 2 * (4 * HP)               # hoisted input projection (VPU)
              + L * 8 * HP                     # gate math
              + 2 * HP,                        # output head
        transcendentals=L * (4 * HP + HP),     # one tanh over gates + tanh(c) per step
        bytes_accessed=(x_p.size * 4 + wih_row.size * 4 + whh_p.size * 2
                        + b_p.size * 4 + wout_p.size * 4 + bout_p.size * 4
                        + HP * 4),
    )

    vmem = pl.BlockSpec(memory_space=pltpu.MemorySpace.VMEM)
    out = pl.pallas_call(
        lstm_kernel,
        out_shape=jax.ShapeDtypeStruct((1, HP), jnp.float32),
        in_specs=[vmem] * 6,
        out_specs=vmem,
        scratch_shapes=[pltpu.VMEM((L, 4 * HP), jnp.float32)],        # hoisted gates
        cost_estimate=cost,
    )(x_p, wih_row, whh_p, b_p, wout_p, bout_p)

    return out[0, 0:OUTPUT_SIZE]   # matches torch pred[-1] shape (1,)


def reference_forward(seq, params):
    """Pure-JAX (f32) reference of the PyTorch forward pass."""
    w_ih, w_hh, b_ih, b_hh, w_lin, b_lin = params
    h = jnp.zeros((1, HIDDEN), jnp.float32)
    c = jnp.zeros((1, HIDDEN), jnp.float32)
    x = seq.reshape(-1, 1, INPUT_SIZE).astype(jnp.float32)
    for t in range(x.shape[0]):
        gates = x[t] @ w_ih.T + b_ih + h @ w_hh.T + b_hh
        i = jax.nn.sigmoid(gates[:, 0 * HIDDEN:1 * HIDDEN])
        f = jax.nn.sigmoid(gates[:, 1 * HIDDEN:2 * HIDDEN])
        g = jnp.tanh(gates[:, 2 * HIDDEN:3 * HIDDEN])
        o = jax.nn.sigmoid(gates[:, 3 * HIDDEN:4 * HIDDEN])
        c = f * c + i * g
        h = o * jnp.tanh(c)
    pred_last = h @ w_lin.T + b_lin
    return pred_last.reshape(OUTPUT_SIZE)


def init_params(key):
    """Deterministic init matching the PyTorch parameter shapes."""
    k = 1.0 / jnp.sqrt(HIDDEN)
    keys = jax.random.split(key, 6)
    w_ih = jax.random.uniform(keys[0], (4 * HIDDEN, INPUT_SIZE), jnp.float32, -k, k)
    w_hh = jax.random.uniform(keys[1], (4 * HIDDEN, HIDDEN), jnp.float32, -k, k)
    b_ih = jax.random.uniform(keys[2], (4 * HIDDEN,), jnp.float32, -k, k)
    b_hh = jax.random.uniform(keys[3], (4 * HIDDEN,), jnp.float32, -k, k)
    w_lin = jax.random.uniform(keys[4], (OUTPUT_SIZE, HIDDEN), jnp.float32, -k, k)
    b_lin = jax.random.uniform(keys[5], (OUTPUT_SIZE,), jnp.float32, -k, k)
    return (w_ih, w_hh, b_ih, b_hh, w_lin, b_lin)


if __name__ == "__main__":
    key = jax.random.PRNGKey(0)
    pkey, xkey = jax.random.split(key)
    params = init_params(pkey)
    seq = jax.random.normal(xkey, (SEQ_LEN,), jnp.float32)   # the "seq" input

    pred = lstm_network_forward(seq, params)
    pred = jax.block_until_ready(pred)

    ref = reference_forward(seq, params)
    assert pred.shape == (OUTPUT_SIZE,)
    # recurrent weights are bf16 in-kernel (f32 accumulate) -> relaxed tolerance
    assert jnp.allclose(pred, ref, atol=2e-2, rtol=2e-2), (pred, ref)

    # TODO(synk): torch module carries self.hidden across calls; this kernel
    # (like the module right after construction) starts from zero h/c each call.
    print("KERNEL_OK")
</pallas_src>

<mosaic_0001>
module attributes {stable_mosaic.version = 11 : i64} {
  func.func @lstm_kernel(%arg0: memref<8x1xf32, #tpu.memory_space<vmem>>, %arg1: memref<1x512xf32, #tpu.memory_space<vmem>>, %arg2: memref<128x512xbf16, #tpu.memory_space<vmem>>, %arg3: memref<1x512xf32, #tpu.memory_space<vmem>>, %arg4: memref<1x128xf32, #tpu.memory_space<vmem>>, %arg5: memref<1x128xf32, #tpu.memory_space<vmem>>, %arg6: memref<1x128xf32, #tpu.memory_space<vmem>>, %arg7: memref<8x512xf32, #tpu.memory_space<vmem>>) attributes {dimension_semantics = [], scalar_prefetch = 0 : i64, scratch_operands = 1 : i64, tpu.core_type = #tpu.core_type<tc>} {
    %c0 = arith.constant 0 : index
    %c0_0 = arith.constant 0 : index
    %0 = vector.load %arg0[%c0, %c0_0] : memref<8x1xf32, #tpu.memory_space<vmem>>, vector<8x1xf32>
    %c0_1 = arith.constant 0 : index
    %c0_2 = arith.constant 0 : index
    %1 = vector.load %arg1[%c0_1, %c0_2] : memref<1x512xf32, #tpu.memory_space<vmem>>, vector<1x512xf32>
    %2 = vector.broadcast %0 : vector<8x1xf32> to vector<8x512xf32>
    %3 = vector.broadcast %1 : vector<1x512xf32> to vector<8x512xf32>
    %4 = arith.mulf %2, %3 : vector<8x512xf32>
    %c0_3 = arith.constant 0 : index
    %c0_4 = arith.constant 0 : index
    %5 = vector.load %arg3[%c0_3, %c0_4] : memref<1x512xf32, #tpu.memory_space<vmem>>, vector<1x512xf32>
    %6 = vector.broadcast %5 : vector<1x512xf32> to vector<8x512xf32>
    %7 = arith.addf %4, %6 : vector<8x512xf32>
    %c0_5 = arith.constant 0 : index
    %c0_6 = arith.constant 0 : index
    %8 = vector.load %arg7[%c0_5, %c0_6] : memref<8x512xf32, #tpu.memory_space<vmem>>, vector<8x512xf32>
    tpu.vector_store %arg7[%c0_5, %c0_6], %7 {strides = array<i32>} : memref<8x512xf32, #tpu.memory_space<vmem>>, vector<8x512xf32>,
    %cst = arith.constant 0.000000e+00 : f32
    %9 = vector.broadcast %cst : f32 to vector<1x128xf32>
    %cst_7 = arith.constant 0.000000e+00 : f32
    %10 = vector.broadcast %cst_7 : f32 to vector<1x128xf32>
    %c0_i32 = arith.constant 0 : i32
    %11 = arith.truncf %9 : vector<1x128xf32> to vector<1x128xbf16>
    %c0_8 = arith.constant 0 : index
    %c0_9 = arith.constant 0 : index
    %12 = vector.load %arg2[%c0_8, %c0_9] : memref<128x512xbf16, #tpu.memory_space<vmem>>, vector<128x512xbf16>
    %cst_10 = arith.constant dense<0.000000e+00> : vector<1x512xf32>
    %13 = tpu.matmul %11, %12, %cst_10 {dimension_numbers = #tpu.dot_dimension_numbers<[1], [0], [0], [1], [0, 0, 1, 1], [], []>} : vector<1x128xbf16>, vector<128x512xbf16>, vector<1x512xf32> -> vector<1x512xf32>
    %14 = arith.index_cast %c0_i32 : i32 to index
    %c0_11 = arith.constant 0 : index
    %15 = vector.load %arg7[%14, %c0_11] : memref<8x512xf32, #tpu.memory_space<vmem>>, vector<1x512xf32>
    %16 = arith.addf %13, %15 : vector<1x512xf32>
    %17 = math.tanh %16 : vector<1x512xf32>
    %18 = vector.extract_strided_slice %17 {offsets = [0, 0], sizes = [1, 384], strides = [1, 1]} : vector<1x512xf32> to vector<1x384xf32>
    %cst_12 = arith.constant 5.000000e-01 : f32
    %19 = vector.broadcast %cst_12 : f32 to vector<1x384xf32>
    %20 = arith.mulf %19, %18 : vector<1x384xf32>
    %cst_13 = arith.constant 5.000000e-01 : f32
    %21 = vector.broadcast %cst_13 : f32 to vector<1x384xf32>
    %22 = arith.addf %21, %20 : vector<1x384xf32>
    %23 = vector.extract_strided_slice %22 {offsets = [0, 0], sizes = [1, 128], strides = [1, 1]} : vector<1x384xf32> to vector<1x128xf32>
    %24 = vector.extract_strided_slice %22 {offsets = [0, 128], sizes = [1, 128], strides = [1, 1]} : vector<1x384xf32> to vector<1x128xf32>
    %25 = vector.extract_strided_slice %22 {offsets = [0, 256], sizes = [1, 128], strides = [1, 1]} : vector<1x384xf32> to vector<1x128xf32>
    %26 = vector.extract_strided_slice %17 {offsets = [0, 384], sizes = [1, 128], strides = [1, 1]} : vector<1x512xf32> to vector<1x128xf32>
    %27 = arith.mulf %24, %10 : vector<1x128xf32>
    %28 = arith.mulf %23, %26 : vector<1x128xf32>
    %29 = arith.addf %27, %28 : vector<1x128xf32>
    %30 = math.tanh %29 : vector<1x128xf32>
    %31 = arith.mulf %25, %30 : vector<1x128xf32>
    %c1_i32 = arith.constant 1 : i32
    %32 = arith.truncf %31 : vector<1x128xf32> to vector<1x128xbf16>
    %c0_14 = arith.constant 0 : index
    %c0_15 = arith.constant 0 : index
    %33 = vector.load %arg2[%c0_14, %c0_15] : memref<128x512xbf16, #tpu.memory_space<vmem>>, vector<128x512xbf16>
    %cst_16 = arith.constant dense<0.000000e+00> : vector<1x512xf32>
    %34 = tpu.matmul %32, %33, %cst_16 {dimension_numbers = #tpu.dot_dimension_numbers<[1], [0], [0], [1], [0, 0, 1, 1], [], []>} : vector<1x128xbf16>, vector<128x512xbf16>, vector<1x512xf32> -> vector<1x512xf32>
    %35 = arith.index_cast %c1_i32 : i32 to index
    %c0_17 = arith.constant 0 : index
    %36 = vector.load %arg7[%35, %c0_17] : memref<8x512xf32, #tpu.memory_space<vmem>>, vector<1x512xf32>
    %37 = arith.addf %34, %36 : vector<1x512xf32>
    %38 = math.tanh %37 : vector<1x512xf32>
    %39 = vector.extract_strided_slice %38 {offsets = [0, 0], sizes = [1, 384], strides = [1, 1]} : vector<1x512xf32> to vector<1x384xf32>
    %cst_18 = arith.constant 5.000000e-01 : f32
    %40 = vector.broadcast %cst_18 : f32 to vector<1x384xf32>
    %41 = arith.mulf %40, %39 : vector<1x384xf32>
    %cst_19 = arith.constant 5.000000e-01 : f32
    %42 = vector.broadcast %cst_19 : f32 to vector<1x384xf32>
    %43 = arith.addf %42, %41 : vector<1x384xf32>
    %44 = vector.extract_strided_slice %43 {offsets = [0, 0], sizes = [1, 128], strides = [1, 1]} : vector<1x384xf32> to vector<1x128xf32>
    %45 = vector.extract_strided_slice %43 {offsets = [0, 128], sizes = [1, 128], strides = [1, 1]} : vector<1x384xf32> to vector<1x128xf32>
    %46 = vector.extract_strided_slice %43 {offsets = [0, 256], sizes = [1, 128], strides = [1, 1]} : vector<1x384xf32> to vector<1x128xf32>
    %47 = vector.extract_strided_slice %38 {offsets = [0, 384], sizes = [1, 128], strides = [1, 1]} : vector<1x512xf32> to vector<1x128xf32>
    %48 = arith.mulf %45, %29 : vector<1x128xf32>
    %49 = arith.mulf %44, %47 : vector<1x128xf32>
    %50 = arith.addf %48, %49 : vector<1x128xf32>
    %51 = math.tanh %50 : vector<1x128xf32>
    %52 = arith.mulf %46, %51 : vector<1x128xf32>
    %c2_i32 = arith.constant 2 : i32
    %53 = arith.truncf %52 : vector<1x128xf32> to vector<1x128xbf16>
    %c0_20 = arith.constant 0 : index
    %c0_21 = arith.constant 0 : index
    %54 = vector.load %arg2[%c0_20, %c0_21] : memref<128x512xbf16, #tpu.memory_space<vmem>>, vector<128x512xbf16>
    %cst_22 = arith.constant dense<0.000000e+00> : vector<1x512xf32>
    %55 = tpu.matmul %53, %54, %cst_22 {dimension_numbers = #tpu.dot_dimension_numbers<[1], [0], [0], [1], [0, 0, 1, 1], [], []>} : vector<1x128xbf16>, vector<128x512xbf16>, vector<1x512xf32> -> vector<1x512xf32>
    %56 = arith.index_cast %c2_i32 : i32 to index
    %c0_23 = arith.constant 0 : index
    %57 = vector.load %arg7[%56, %c0_23] : memref<8x512xf32, #tpu.memory_space<vmem>>, vector<1x512xf32>
    %58 = arith.addf %55, %57 : vector<1x512xf32>
    %59 = math.tanh %58 : vector<1x512xf32>
    %60 = vector.extract_strided_slice %59 {offsets = [0, 0], sizes = [1, 384], strides = [1, 1]} : vector<1x512xf32> to vector<1x384xf32>
    %cst_24 = arith.constant 5.000000e-01 : f32
    %61 = vector.broadcast %cst_24 : f32 to vector<1x384xf32>
    %62 = arith.mulf %61, %60 : vector<1x384xf32>
    %cst_25 = arith.constant 5.000000e-01 : f32
    %63 = vector.broadcast %cst_25 : f32 to vector<1x384xf32>
    %64 = arith.addf %63, %62 : vector<1x384xf32>
    %65 = vector.extract_strided_slice %64 {offsets = [0, 0], sizes = [1, 128], strides = [1, 1]} : vector<1x384xf32> to vector<1x128xf32>
    %66 = vector.extract_strided_slice %64 {offsets = [0, 128], sizes = [1, 128], strides = [1, 1]} : vector<1x384xf32> to vector<1x128xf32>
    %67 = vector.extract_strided_slice %64 {offsets = [0, 256], sizes = [1, 128], strides = [1, 1]} : vector<1x384xf32> to vector<1x128xf32>
    %68 = vector.extract_strided_slice %59 {offsets = [0, 384], sizes = [1, 128], strides = [1, 1]} : vector<1x512xf32> to vector<1x128xf32>
    %69 = arith.mulf %66, %50 : vector<1x128xf32>
    %70 = arith.mulf %65, %68 : vector<1x128xf32>
    %71 = arith.addf %69, %70 : vector<1x128xf32>
    %72 = math.tanh %71 : vector<1x128xf32>
    %73 = arith.mulf %67, %72 : vector<1x128xf32>
    %c3_i32 = arith.constant 3 : i32
    %74 = arith.truncf %73 : vector<1x128xf32> to vector<1x128xbf16>
    %c0_26 = arith.constant 0 : index
    %c0_27 = arith.constant 0 : index
    %75 = vector.load %arg2[%c0_26, %c0_27] : memref<128x512xbf16, #tpu.memory_space<vmem>>, vector<128x512xbf16>
    %cst_28 = arith.constant dense<0.000000e+00> : vector<1x512xf32>
    %76 = tpu.matmul %74, %75, %cst_28 {dimension_numbers = #tpu.dot_dimension_numbers<[1], [0], [0], [1], [0, 0, 1, 1], [], []>} : vector<1x128xbf16>, vector<128x512xbf16>, vector<1x512xf32> -> vector<1x512xf32>
    %77 = arith.index_cast %c3_i32 : i32 to index
    %c0_29 = arith.constant 0 : index
    %78 = vector.load %arg7[%77, %c0_29] : memref<8x512xf32, #tpu.memory_space<vmem>>, vector<1x512xf32>
    %79 = arith.addf %76, %78 : vector<1x512xf32>
    %80 = math.tanh %79 : vector<1x512xf32>
    %81 = vector.extract_strided_slice %80 {offsets = [0, 0], sizes = [1, 384], strides = [1, 1]} : vector<1x512xf32> to vector<1x384xf32>
    %cst_30 = arith.constant 5.000000e-01 : f32
    %82 = vector.broadcast %cst_30 : f32 to vector<1x384xf32>
    %83 = arith.mulf %82, %81 : vector<1x384xf32>
    %cst_31 = arith.constant 5.000000e-01 : f32
    %84 = vector.broadcast %cst_31 : f32 to vector<1x384xf32>
    %85 = arith.addf %84, %83 : vector<1x384xf32>
    %86 = vector.extract_strided_slice %85 {offsets = [0, 0], sizes = [1, 128], strides = [1, 1]} : vector<1x384xf32> to vector<1x128xf32>
    %87 = vector.extract_strided_slice %85 {offsets = [0, 128], sizes = [1, 128], strides = [1, 1]} : vector<1x384xf32> to vector<1x128xf32>
    %88 = vector.extract_strided_slice %85 {offsets = [0, 256], sizes = [1, 128], strides = [1, 1]} : vector<1x384xf32> to vector<1x128xf32>
    %89 = vector.extract_strided_slice %80 {offsets = [0, 384], sizes = [1, 128], strides = [1, 1]} : vector<1x512xf32> to vector<1x128xf32>
    %90 = arith.mulf %87, %71 : vector<1x128xf32>
    %91 = arith.mulf %86, %89 : vector<1x128xf32>
    %92 = arith.addf %90, %91 : vector<1x128xf32>
    %93 = math.tanh %92 : vector<1x128xf32>
    %94 = arith.mulf %88, %93 : vector<1x128xf32>
    %c4_i32 = arith.constant 4 : i32
    %95 = arith.truncf %94 : vector<1x128xf32> to vector<1x128xbf16>
    %c0_32 = arith.constant 0 : index
    %c0_33 = arith.constant 0 : index
    %96 = vector.load %arg2[%c0_32, %c0_33] : memref<128x512xbf16, #tpu.memory_space<vmem>>, vector<128x512xbf16>
    %cst_34 = arith.constant dense<0.000000e+00> : vector<1x512xf32>
    %97 = tpu.matmul %95, %96, %cst_34 {dimension_numbers = #tpu.dot_dimension_numbers<[1], [0], [0], [1], [0, 0, 1, 1], [], []>} : vector<1x128xbf16>, vector<128x512xbf16>, vector<1x512xf32> -> vector<1x512xf32>
    %98 = arith.index_cast %c4_i32 : i32 to index
    %c0_35 = arith.constant 0 : index
    %99 = vector.load %arg7[%98, %c0_35] : memref<8x512xf32, #tpu.memory_space<vmem>>, vector<1x512xf32>
    %100 = arith.addf %97, %99 : vector<1x512xf32>
    %101 = math.tanh %100 : vector<1x512xf32>
    %102 = vector.extract_strided_slice %101 {offsets = [0, 0], sizes = [1, 384], strides = [1, 1]} : vector<1x512xf32> to vector<1x384xf32>
    %cst_36 = arith.constant 5.000000e-01 : f32
    %103 = vector.broadcast %cst_36 : f32 to vector<1x384xf32>
    %104 = arith.mulf %103, %102 : vector<1x384xf32>
    %cst_37 = arith.constant 5.000000e-01 : f32
    %105 = vector.broadcast %cst_37 : f32 to vector<1x384xf32>
    %106 = arith.addf %105, %104 : vector<1x384xf32>
    %107 = vector.extract_strided_slice %106 {offsets = [0, 0], sizes = [1, 128], strides = [1, 1]} : vector<1x384xf32> to vector<1x128xf32>
    %108 = vector.extract_strided_slice %106 {offsets = [0, 128], sizes = [1, 128], strides = [1, 1]} : vector<1x384xf32> to vector<1x128xf32>
    %109 = vector.extract_strided_slice %106 {offsets = [0, 256], sizes = [1, 128], strides = [1, 1]} : vector<1x384xf32> to vector<1x128xf32>
    %110 = vector.extract_strided_slice %101 {offsets = [0, 384], sizes = [1, 128], strides = [1, 1]} : vector<1x512xf32> to vector<1x128xf32>
    %111 = arith.mulf %108, %92 : vector<1x128xf32>
    %112 = arith.mulf %107, %110 : vector<1x128xf32>
    %113 = arith.addf %111, %112 : vector<1x128xf32>
    %114 = math.tanh %113 : vector<1x128xf32>
    %115 = arith.mulf %109, %114 : vector<1x128xf32>
    %c5_i32 = arith.constant 5 : i32
    %116 = arith.truncf %115 : vector<1x128xf32> to vector<1x128xbf16>
    %c0_38 = arith.constant 0 : index
    %c0_39 = arith.constant 0 : index
    %117 = vector.load %arg2[%c0_38, %c0_39] : memref<128x512xbf16, #tpu.memory_space<vmem>>, vector<128x512xbf16>
    %cst_40 = arith.constant dense<0.000000e+00> : vector<1x512xf32>
    %118 = tpu.matmul %116, %117, %cst_40 {dimension_numbers = #tpu.dot_dimension_numbers<[1], [0], [0], [1], [0, 0, 1, 1], [], []>} : vector<1x128xbf16>, vector<128x512xbf16>, vector<1x512xf32> -> vector<1x512xf32>
    %119 = arith.index_cast %c5_i32 : i32 to index
    %c0_41 = arith.constant 0 : index
    %120 = vector.load %arg7[%119, %c0_41] : memref<8x512xf32, #tpu.memory_space<vmem>>, vector<1x512xf32>
    %121 = arith.addf %118, %120 : vector<1x512xf32>
    %122 = math.tanh %121 : vector<1x512xf32>
    %123 = vector.extract_strided_slice %122 {offsets = [0, 0], sizes = [1, 384], strides = [1, 1]} : vector<1x512xf32> to vector<1x384xf32>
    %cst_42 = arith.constant 5.000000e-01 : f32
    %124 = vector.broadcast %cst_42 : f32 to vector<1x384xf32>
    %125 = arith.mulf %124, %123 : vector<1x384xf32>
    %cst_43 = arith.constant 5.000000e-01 : f32
    %126 = vector.broadcast %cst_43 : f32 to vector<1x384xf32>
    %127 = arith.addf %126, %125 : vector<1x384xf32>
    %128 = vector.extract_strided_slice %127 {offsets = [0, 0], sizes = [1, 128], strides = [1, 1]} : vector<1x384xf32> to vector<1x128xf32>
    %129 = vector.extract_strided_slice %127 {offsets = [0, 128], sizes = [1, 128], strides = [1, 1]} : vector<1x384xf32> to vector<1x128xf32>
    %130 = vector.extract_strided_slice %127 {offsets = [0, 256], sizes = [1, 128], strides = [1, 1]} : vector<1x384xf32> to vector<1x128xf32>
    %131 = vector.extract_strided_slice %122 {offsets = [0, 384], sizes = [1, 128], strides = [1, 1]} : vector<1x512xf32> to vector<1x128xf32>
    %132 = arith.mulf %129, %113 : vector<1x128xf32>
    %133 = arith.mulf %128, %131 : vector<1x128xf32>
    %134 = arith.addf %132, %133 : vector<1x128xf32>
    %135 = math.tanh %134 : vector<1x128xf32>
    %136 = arith.mulf %130, %135 : vector<1x128xf32>
    %c6_i32 = arith.constant 6 : i32
    %137 = arith.truncf %136 : vector<1x128xf32> to vector<1x128xbf16>
    %c0_44 = arith.constant 0 : index
    %c0_45 = arith.constant 0 : index
    %138 = vector.load %arg2[%c0_44, %c0_45] : memref<128x512xbf16, #tpu.memory_space<vmem>>, vector<128x512xbf16>
    %cst_46 = arith.constant dense<0.000000e+00> : vector<1x512xf32>
    %139 = tpu.matmul %137, %138, %cst_46 {dimension_numbers = #tpu.dot_dimension_numbers<[1], [0], [0], [1], [0, 0, 1, 1], [], []>} : vector<1x128xbf16>, vector<128x512xbf16>, vector<1x512xf32> -> vector<1x512xf32>
    %140 = arith.index_cast %c6_i32 : i32 to index
    %c0_47 = arith.constant 0 : index
    %141 = vector.load %arg7[%140, %c0_47] : memref<8x512xf32, #tpu.memory_space<vmem>>, vector<1x512xf32>
    %142 = arith.addf %139, %141 : vector<1x512xf32>
    %143 = math.tanh %142 : vector<1x512xf32>
    %144 = vector.extract_strided_slice %143 {offsets = [0, 0], sizes = [1, 384], strides = [1, 1]} : vector<1x512xf32> to vector<1x384xf32>
    %cst_48 = arith.constant 5.000000e-01 : f32
    %145 = vector.broadcast %cst_48 : f32 to vector<1x384xf32>
    %146 = arith.mulf %145, %144 : vector<1x384xf32>
    %cst_49 = arith.constant 5.000000e-01 : f32
    %147 = vector.broadcast %cst_49 : f32 to vector<1x384xf32>
    %148 = arith.addf %147, %146 : vector<1x384xf32>
    %149 = vector.extract_strided_slice %148 {offsets = [0, 0], sizes = [1, 128], strides = [1, 1]} : vector<1x384xf32> to vector<1x128xf32>
    %150 = vector.extract_strided_slice %148 {offsets = [0, 128], sizes = [1, 128], strides = [1, 1]} : vector<1x384xf32> to vector<1x128xf32>
    %151 = vector.extract_strided_slice %148 {offsets = [0, 256], sizes = [1, 128], strides = [1, 1]} : vector<1x384xf32> to vector<1x128xf32>
    %152 = vector.extract_strided_slice %143 {offsets = [0, 384], sizes = [1, 128], strides = [1, 1]} : vector<1x512xf32> to vector<1x128xf32>
    %153 = arith.mulf %150, %134 : vector<1x128xf32>
    %154 = arith.mulf %149, %152 : vector<1x128xf32>
    %155 = arith.addf %153, %154 : vector<1x128xf32>
    %156 = math.tanh %155 : vector<1x128xf32>
    %157 = arith.mulf %151, %156 : vector<1x128xf32>
    %c7_i32 = arith.constant 7 : i32
    %158 = arith.truncf %157 : vector<1x128xf32> to vector<1x128xbf16>
    %c0_50 = arith.constant 0 : index
    %c0_51 = arith.constant 0 : index
    %159 = vector.load %arg2[%c0_50, %c0_51] : memref<128x512xbf16, #tpu.memory_space<vmem>>, vector<128x512xbf16>
    %cst_52 = arith.constant dense<0.000000e+00> : vector<1x512xf32>
    %160 = tpu.matmul %158, %159, %cst_52 {dimension_numbers = #tpu.dot_dimension_numbers<[1], [0], [0], [1], [0, 0, 1, 1], [], []>} : vector<1x128xbf16>, vector<128x512xbf16>, vector<1x512xf32> -> vector<1x512xf32>
    %161 = arith.index_cast %c7_i32 : i32 to index
    %c0_53 = arith.constant 0 : index
    %162 = vector.load %arg7[%161, %c0_53] : memref<8x512xf32, #tpu.memory_space<vmem>>, vector<1x512xf32>
    %163 = arith.addf %160, %162 : vector<1x512xf32>
    %164 = math.tanh %163 : vector<1x512xf32>
    %165 = vector.extract_strided_slice %164 {offsets = [0, 0], sizes = [1, 384], strides = [1, 1]} : vector<1x512xf32> to vector<1x384xf32>
    %cst_54 = arith.constant 5.000000e-01 : f32
    %166 = vector.broadcast %cst_54 : f32 to vector<1x384xf32>
    %167 = arith.mulf %166, %165 : vector<1x384xf32>
    %cst_55 = arith.constant 5.000000e-01 : f32
    %168 = vector.broadcast %cst_55 : f32 to vector<1x384xf32>
    %169 = arith.addf %168, %167 : vector<1x384xf32>
    %170 = vector.extract_strided_slice %169 {offsets = [0, 0], sizes = [1, 128], strides = [1, 1]} : vector<1x384xf32> to vector<1x128xf32>
    %171 = vector.extract_strided_slice %169 {offsets = [0, 128], sizes = [1, 128], strides = [1, 1]} : vector<1x384xf32> to vector<1x128xf32>
    %172 = vector.extract_strided_slice %169 {offsets = [0, 256], sizes = [1, 128], strides = [1, 1]} : vector<1x384xf32> to vector<1x128xf32>
    %173 = vector.extract_strided_slice %164 {offsets = [0, 384], sizes = [1, 128], strides = [1, 1]} : vector<1x512xf32> to vector<1x128xf32>
    %174 = arith.mulf %171, %155 : vector<1x128xf32>
    %175 = arith.mulf %170, %173 : vector<1x128xf32>
    %176 = arith.addf %174, %175 : vector<1x128xf32>
    %177 = math.tanh %176 : vector<1x128xf32>
    %178 = arith.mulf %172, %177 : vector<1x128xf32>
    %c8_i32 = arith.constant 8 : i32
    %c0_56 = arith.constant 0 : index
    %c0_57 = arith.constant 0 : index
    %179 = vector.load %arg4[%c0_56, %c0_57] : memref<1x128xf32, #tpu.memory_space<vmem>>, vector<1x128xf32>
    %180 = arith.mulf %178, %179 : vector<1x128xf32>
    %cst_58 = arith.constant dense<0.000000e+00> : vector<1xf32>
    %181 = vector.multi_reduction <add>, %180, %cst_58 [1] : vector<1x128xf32> to vector<1xf32>
    %182 = vector.shape_cast %181 : vector<1xf32> to vector<1x1xf32>
    %c0_59 = arith.constant 0 : index
    %c0_60 = arith.constant 0 : index
    %183 = vector.load %arg5[%c0_59, %c0_60] : memref<1x128xf32, #tpu.memory_space<vmem>>, vector<1x128xf32>
    %184 = vector.broadcast %182 : vector<1x1xf32> to vector<1x128xf32>
    %185 = arith.addf %184, %183 : vector<1x128xf32>
    %c0_61 = arith.constant 0 : index
    %c0_62 = arith.constant 0 : index
    %186 = vector.load %arg6[%c0_61, %c0_62] : memref<1x128xf32, #tpu.memory_space<vmem>>, vector<1x128xf32>
    tpu.vector_store %arg6[%c0_61, %c0_62], %185 {strides = array<i32>} : memref<1x128xf32, #tpu.memory_space<vmem>>, vector<1x128xf32>,
    return
  }
}

</mosaic_0001>

<llo_original>
// kernel: tpu_custom_call.1
$region0: #{tpu_custom_call.1}
  #allocation0 [shape = 'u32[]', space=smem, size = 0x4, offset = 0x4, fixed_abs, tag = 'smem constant byte address 0x4 - core index']
  #allocation1 [shape = 'u32[144,128]{1,0:T(1,128)}', space=vmem, size = 0x12000, scoped, tag = 'internal scratch']
  #allocation2 [shape = 'f32[8,512]{1,0:T(8,128)}', space=vmem, size = 0x4000, scoped, tag = 'scratch operand']
  %s0 = inlined_call_operand.vmem [shape: f32[8,1], index: 0, kind: input, shape index: {}]
  %s1 = inlined_call_operand.vmem [shape: f32[1,512], index: 1, kind: input, shape index: {}]
  %s2 = inlined_call_operand.hbm [shape: bf16[128,512], index: 2, kind: input, shape index: {}]
  %s3 = inlined_call_operand.vmem [shape: f32[1,512], index: 3, kind: input, shape index: {}]
  %s4 = inlined_call_operand.vmem [shape: f32[1,128], index: 4, kind: input, shape index: {}]
  %s5 = inlined_call_operand.vmem [shape: f32[1,128], index: 5, kind: input, shape index: {}]
  %s6 = inlined_call_operand.hbm [shape: f32[1,128], index: 6, kind: output, shape index: {}]
  %s7 = sld [smem:[#allocation0]]
  $region38: #{tpu_custom_call.1} parent=0
    _
  %s9 = ssub.s32 1, %s7
  %s10 = scalar_select 0, %s9, %s7
  $region1: #{tpu_custom_call.1} parent=0
    #allocation3 [shape = 'u8[131072]{0}', space=vmem, size = 0x20000, scoped, tag = 'input window, operand 2, single buffered']
    #allocation4 [shape = 's32[1]{0}', space=sflag, size = 0x4, scoped, tag = 'scoped memory for tpu_custom_call.1']
    #allocation5 [shape = 's32[1]{0}', space=sflag, size = 0x4, scoped, tag = 'scoped memory for tpu_custom_call.1']
    #allocation6 [shape = 'u8[512]{0}', space=vmem, size = 0x400, scoped, tag = 'output window, operand 0, single buffered']
    %11 = vsyncpa [#allocation4], 0
    %12 = vsyncpa [#allocation5], 0
    // Predicated region
    $region2: #{tpu_custom_call.1} parent=1 // pred_check
      _
    $region3: #{tpu_custom_call.1} parent=1 // pred_check_branch
      %14 = sbr.rel (0) target = $region5
    $region4: #{tpu_custom_call.1} parent=1 // pred_region
      _
    $region5: #{tpu_custom_call.1} parent=1 // pred_fallthru
      _
    // Predicated region
    $region6: #{tpu_custom_call.1} parent=1 // pred_check
      _
    $region7: #{tpu_custom_call.1} parent=1 // pred_check_branch
      %16 = sbr.rel (0) target = $region9
    $region8: #{tpu_custom_call.1} parent=1 // pred_region
      _
    $region9: #{tpu_custom_call.1} parent=1 // pred_fallthru
      _
    // Predicated region
    $region10: #{tpu_custom_call.1} parent=1 // pred_check
      _
    $region11: #{tpu_custom_call.1} parent=1 // pred_check_branch
      %18 = sbr.rel (0) target = $region13
    $region12: #{tpu_custom_call.1} parent=1 // pred_region
      %s20 = ssub.s32 4096, 4096
      %21 = vsyncadd [#allocation4], %s20
      %s22 = sshll.u32 [#allocation3], 4
      %s23 = int_to_ptr.vmem [resolvable:$true] %s22
      %28 = dma.hbm_to_vmem [thread:$0]  %s2, 4096, %s23, [#allocation4], 256, 256, 16
    $region13: #{tpu_custom_call.1} parent=1 // pred_fallthru
      _
    // Predicated region
    $region14: #{tpu_custom_call.1} parent=1 // pred_check
      _
    $region15: #{tpu_custom_call.1} parent=1 // pred_check_branch
      %30 = sbr.rel (0) target = $region17
    $region16: #{tpu_custom_call.1} parent=1 // pred_region
      _
    $region17: #{tpu_custom_call.1} parent=1 // pred_fallthru
      _
    // Predicated region
    $region18: #{tpu_custom_call.1} parent=1 // pred_check
      _
    $region19: #{tpu_custom_call.1} parent=1 // pred_check_branch
      %32 = sbr.rel (0) target = $region21
    $region20: #{tpu_custom_call.1} parent=1 // pred_region
      _
    $region21: #{tpu_custom_call.1} parent=1 // pred_fallthru
      _
    // Predicated region
    $region22: #{tpu_custom_call.1} parent=1 // pred_check
      _
    $region23: #{tpu_custom_call.1} parent=1 // pred_check_branch
      %34 = sbr.rel (0) target = $region25
    $region24: #{tpu_custom_call.1} parent=1 // pred_region
      _
    $region25: #{tpu_custom_call.1} parent=1 // pred_fallthru
      _
    // Predicated region
    $region26: #{tpu_custom_call.1} parent=1 // pred_check
      _
    $region27: #{tpu_custom_call.1} parent=1 // pred_check_branch
      %36 = sbr.rel (0) target = $region29
    $region28: #{tpu_custom_call.1} parent=1 // pred_region
      %37 = dma.done [#allocation4], 4096
    $region29: #{tpu_custom_call.1} parent=1 // pred_fallthru
      _
    %v39 = vld [vmem:[%s0] sm:$0xff]
    %v40 = vld [vmem:[%s1] sm:$0xf]
    %42 = vset.pattern.permute.xlu0 0
    %43 = vperm.xlu0 %42, %v39
    %v44 = vpop.permute.xlu0 %43
    %v47 = vlaneseq
    %v48 = vshrl.u32 %v47, 7
    %v49 = vsub.s32 0, %v48
    %v50 = vrot.slane %v40, %v49
    %v51 = vlaneseq
    %v52 = vshrl.u32 %v51, 7
    %v53 = vsub.s32 1, %v52
    %v54 = vrot.slane %v40, %v53
    %v55 = vlaneseq
    %v56 = vshrl.u32 %v55, 7
    %v57 = vsub.s32 2, %v56
    %v58 = vrot.slane %v40, %v57
    %v59 = vlaneseq
    %v60 = vshrl.u32 %v59, 7
    %v61 = vsub.s32 3, %v60
    %v62 = vrot.slane %v40, %v61
    %v67 = vmul.f32 %v44, %v50
    %v68 = vmul.f32 %v44, %v54
    %v69 = vmul.f32 %v44, %v58
    %v70 = vmul.f32 %v44, %v62
    %v71 = vld [vmem:[%s3] sm:$0xf]
    %v73 = vlaneseq
    %v74 = vshrl.u32 %v73, 7
    %v75 = vsub.s32 0, %v74
    %v76 = vrot.slane %v71, %v75
    %v77 = vlaneseq
    %v78 = vshrl.u32 %v77, 7
    %v79 = vsub.s32 1, %v78
    %v80 = vrot.slane %v71, %v79
    %v81 = vlaneseq
    %v82 = vshrl.u32 %v81, 7
    %v83 = vsub.s32 2, %v82
    %v84 = vrot.slane %v71, %v83
    %v85 = vlaneseq
    %v86 = vshrl.u32 %v85, 7
    %v87 = vsub.s32 3, %v86
    %v88 = vrot.slane %v71, %v87
    %v93 = vadd.f32 %v67, %v76
    %v94 = vadd.f32 %v68, %v80
    %v95 = vadd.f32 %v69, %v84
    %v96 = vadd.f32 %v70, %v88
    %97 = vst [vmem:[#allocation2] sm:$0xff] %v93
    %98 = vst [vmem:[#allocation2 + $0x8] sm:$0xff] %v94
    %99 = vst [vmem:[#allocation2 + $0x10] sm:$0xff] %v95
    %100 = vst [vmem:[#allocation2 + $0x18] sm:$0xff] %v96
    %v101 = vld [vmem:[#allocation3] sm:$0xff]
    %v102 = vld [vmem:[#allocation3 + $0x8] sm:$0xff]
    %v103 = vld [vmem:[#allocation3 + $0x10] sm:$0xff]
    %v104 = vld [vmem:[#allocation3 + $0x18] sm:$0xff]
    %v105 = vld [vmem:[#allocation3 + $0x20] sm:$0xff]
    %v106 = vld [vmem:[#allocation3 + $0x28] sm:$0xff]
    %v107 = vld [vmem:[#allocation3 + $0x30] sm:$0xff]
    %v108 = vld [vmem:[#allocation3 + $0x38] sm:$0xff]
    %v109 = vld [vmem:[#allocation3 + $0x40] sm:$0xff]
    %v110 = vld [vmem:[#allocation3 + $0x48] sm:$0xff]
    %v111 = vld [vmem:[#allocation3 + $0x50] sm:$0xff]
    %v112 = vld [vmem:[#allocation3 + $0x58] sm:$0xff]
    %v113 = vld [vmem:[#allocation3 + $0x60] sm:$0xff]
    %v114 = vld [vmem:[#allocation3 + $0x68] sm:$0xff]
    %v115 = vld [vmem:[#allocation3 + $0x70] sm:$0xff]
    %v116 = vld [vmem:[#allocation3 + $0x78] sm:$0xff]
    %v117 = vld [vmem:[#allocation3 + $0x80] sm:$0xff]
    %v118 = vld [vmem:[#allocation3 + $0x88] sm:$0xff]
    %v119 = vld [vmem:[#allocation3 + $0x90] sm:$0xff]
    %v120 = vld [vmem:[#allocation3 + $0x98] sm:$0xff]
    %v121 = vld [vmem:[#allocation3 + $0xa0] sm:$0xff]
    %v122 = vld [vmem:[#allocation3 + $0xa8] sm:$0xff]
    %v123 = vld [vmem:[#allocation3 + $0xb0] sm:$0xff]
    %v124 = vld [vmem:[#allocation3 + $0xb8] sm:$0xff]
    %v125 = vld [vmem:[#allocation3 + $0xc0] sm:$0xff]
    %v126 = vld [vmem:[#allocation3 + $0xc8] sm:$0xff]
    %v127 = vld [vmem:[#allocation3 + $0xd0] sm:$0xff]
    %v128 = vld [vmem:[#allocation3 + $0xd8] sm:$0xff]
    %v129 = vld [vmem:[#allocation3 + $0xe0] sm:$0xff]
    %v130 = vld [vmem:[#allocation3 + $0xe8] sm:$0xff]
    %v131 = vld [vmem:[#allocation3 + $0xf0] sm:$0xff]
    %v132 = vld [vmem:[#allocation3 + $0xf8] sm:$0xff]
    %v133 = vld [vmem:[#allocation2] ss:$8 sm:$0xf]
    %v166 = vunpack.c.l.b16 %v101
    %v167 = vunpack.c.h.b16 %v101
    %v168 = vunpack.c.l.b16 %v102
    %v169 = vunpack.c.h.b16 %v102
    %v170 = vunpack.c.l.b16 %v103
    %v171 = vunpack.c.h.b16 %v103
    %v172 = vunpack.c.l.b16 %v104
    %v173 = vunpack.c.h.b16 %v104
    %v174 = vunpack.c.l.b16 %v105
    %v175 = vunpack.c.h.b16 %v105
    %v176 = vunpack.c.l.b16 %v106
    %v177 = vunpack.c.h.b16 %v106
    %v178 = vunpack.c.l.b16 %v107
    %v179 = vunpack.c.h.b16 %v107
    %v180 = vunpack.c.l.b16 %v108
    %v181 = vunpack.c.h.b16 %v108
    %v182 = vunpack.c.l.b16 %v109
    %v183 = vunpack.c.h.b16 %v109
    %v184 = vunpack.c.l.b16 %v110
    %v185 = vunpack.c.h.b16 %v110
    %v186 = vunpack.c.l.b16 %v111
    %v187 = vunpack.c.h.b16 %v111
    %v188 = vunpack.c.l.b16 %v112
    %v189 = vunpack.c.h.b16 %v112
    %v190 = vunpack.c.l.b16 %v113
    %v191 = vunpack.c.h.b16 %v113
    %v192 = vunpack.c.l.b16 %v114
    %v193 = vunpack.c.h.b16 %v114
    %v194 = vunpack.c.l.b16 %v115
    %v195 = vunpack.c.h.b16 %v115
    %v196 = vunpack.c.l.b16 %v116
    %v197 = vunpack.c.h.b16 %v116
    %v198 = vunpack.c.l.b16 %v117
    %v199 = vunpack.c.h.b16 %v117
    %v200 = vunpack.c.l.b16 %v118
    %v201 = vunpack.c.h.b16 %v118
    %v202 = vunpack.c.l.b16 %v119
    %v203 = vunpack.c.h.b16 %v119
    %v204 = vunpack.c.l.b16 %v120
    %v205 = vunpack.c.h.b16 %v120
    %v206 = vunpack.c.l.b16 %v121
    %v207 = vunpack.c.h.b16 %v121
    %v208 = vunpack.c.l.b16 %v122
    %v209 = vunpack.c.h.b16 %v122
    %v210 = vunpack.c.l.b16 %v123
    %v211 = vunpack.c.h.b16 %v123
    %v212 = vunpack.c.l.b16 %v124
    %v213 = vunpack.c.h.b16 %v124
    %v214 = vunpack.c.l.b16 %v125
    %v215 = vunpack.c.h.b16 %v125
    %v216 = vunpack.c.l.b16 %v126
    %v217 = vunpack.c.h.b16 %v126
    %v218 = vunpack.c.l.b16 %v127
    %v219 = vunpack.c.h.b16 %v127
    %v220 = vunpack.c.l.b16 %v128
    %v221 = vunpack.c.h.b16 %v128
    %v222 = vunpack.c.l.b16 %v129
    %v223 = vunpack.c.h.b16 %v129
    %v224 = vunpack.c.l.b16 %v130
    %v225 = vunpack.c.h.b16 %v130
    %v226 = vunpack.c.l.b16 %v131
    %v227 = vunpack.c.h.b16 %v131
    %v228 = vunpack.c.l.b16 %v132
    %v229 = vunpack.c.h.b16 %v132
    %v230 = vpack.c.b16 %v170, %v166
    %v231 = vpack.c.b16 %v171, %v167
    %v232 = vpack.c.b16 %v172, %v168
    %v233 = vpack.c.b16 %v173, %v169
    %v234 = vpack.c.b16 %v178, %v174
    %v235 = vpack.c.b16 %v179, %v175
    %v236 = vpack.c.b16 %v180, %v176
    %v237 = vpack.c.b16 %v181, %v177
    %v238 = vpack.c.b16 %v186, %v182
    %v239 = vpack.c.b16 %v187, %v183
    %v240 = vpack.c.b16 %v188, %v184
    %v241 = vpack.c.b16 %v189, %v185
    %v242 = vpack.c.b16 %v194, %v190
    %v243 = vpack.c.b16 %v195, %v191
    %v244 = vpack.c.b16 %v196, %v192
    %v245 = vpack.c.b16 %v197, %v193
    %v246 = vpack.c.b16 %v202, %v198
    %v247 = vpack.c.b16 %v203, %v199
    %v248 = vpack.c.b16 %v204, %v200
    %v249 = vpack.c.b16 %v205, %v201
    %v250 = vpack.c.b16 %v210, %v206
    %v251 = vpack.c.b16 %v211, %v207
    %v252 = vpack.c.b16 %v212, %v208
    %v253 = vpack.c.b16 %v213, %v209
    %v254 = vpack.c.b16 %v218, %v214
    %v255 = vpack.c.b16 %v219, %v215
    %v256 = vpack.c.b16 %v220, %v216
    %v257 = vpack.c.b16 %v221, %v217
    %v258 = vpack.c.b16 %v226, %v222
    %v259 = vpack.c.b16 %v227, %v223
    %v260 = vpack.c.b16 %v228, %v224
    %v261 = vpack.c.b16 %v229, %v225
    %v295 = vlaneseq
    %v296 = vshrl.u32 %v295, 7
    %v297 = vsub.s32 0, %v296
    %v298 = vrot.slane %v133, %v297
    %v299 = vlaneseq
    %v300 = vshrl.u32 %v299, 7
    %v301 = vsub.s32 1, %v300
    %v302 = vrot.slane %v133, %v301
    %v303 = vlaneseq
    %v304 = vshrl.u32 %v303, 7
    %v305 = vsub.s32 2, %v304
    %v306 = vrot.slane %v133, %v305
    %v307 = vlaneseq
    %v308 = vshrl.u32 %v307, 7
    %v309 = vsub.s32 3, %v308
    %v310 = vrot.slane %v133, %v309
    %315 = vmatprep.subr.bf16.mxu0 %v231
    %316 = vmatpush1.bf16.msra.mxu0 %v230
    %317 = vmatprep.subr.bf16.mxu0 %v235
    %318 = vmatpush1.bf16.msra.mxu0 %v234
    %319 = vmatprep.subr.bf16.mxu0 %v239
    %320 = vmatpush1.bf16.msra.mxu0 %v238
    %321 = vmatprep.subr.bf16.mxu0 %v243
    %322 = vmatpush1.bf16.msra.mxu0 %v242
    %323 = vmatprep.subr.bf16.mxu0 %v247
    %324 = vmatpush1.bf16.msra.mxu0 %v246
    %325 = vmatprep.subr.bf16.mxu0 %v251
    %326 = vmatpush1.bf16.msra.mxu0 %v250
    %327 = vmatprep.subr.bf16.mxu0 %v255
    %328 = vmatpush1.bf16.msra.mxu0 %v254
    %329 = vmatprep.subr.bf16.mxu0 %v259
    %330 = vmatpush1.bf16.msra.mxu0 %v258
    %331 = vmatprep.subr.bf16.mxu0 0
    %332 = vmatpush1.bf16.msra.mxu0 0
    %333 = vmatprep.subr.bf16.mxu0 0
    %334 = vmatpush1.bf16.msra.mxu0 0
    %335 = vmatprep.subr.bf16.mxu0 0
    %336 = vmatpush1.bf16.msra.mxu0 0
    %337 = vmatprep.subr.bf16.mxu0 0
    %338 = vmatpush1.bf16.msra.mxu0 0
    %339 = vmatprep.subr.bf16.mxu0 0
    %340 = vmatpush1.bf16.msra.mxu0 0
    %341 = vmatprep.subr.bf16.mxu0 0
    %342 = vmatpush1.bf16.msra.mxu0 0
    %343 = vmatprep.subr.bf16.mxu0 0
    %344 = vmatpush1.bf16.msra.mxu0 0
    %345 = vmatprep.subr.bf16.mxu0 0
    %346 = vmatpush1.bf16.msra.mxu0 0
    %347 = vmatprep.mubr.bf16.mxu0 0
    %348 = vmatmul.mubr.bf16.gmra.mrb[0].mxu0 0
    %v349 = vpop.f32.mrb[0].mxu0
    %v350 = vadd.f32 %v298, %v349
    %v351 = vpop.f32.mrb[0].mxu0
    %v352 = vadd.f32 %v302, %v351
    %v353 = vpop.f32.mrb[0].mxu0
    %v354 = vpop.f32.mrb[0].mxu0
    %355 = vdwg.mxu0
    %356 = vmatprep.subr.bf16.mxu0 %v233
    %357 = vmatpush1.bf16.msra.mxu0 %v232
    %358 = vmatprep.subr.bf16.mxu0 %v237
    %359 = vmatpush1.bf16.msra.mxu0 %v236
    %360 = vmatprep.subr.bf16.mxu0 %v241
    %361 = vmatpush1.bf16.msra.mxu0 %v240
    %362 = vmatprep.subr.bf16.mxu0 %v245
    %363 = vmatpush1.bf16.msra.mxu0 %v244
    %364 = vmatprep.subr.bf16.mxu0 %v249
    %365 = vmatpush1.bf16.msra.mxu0 %v248
    %366 = vmatprep.subr.bf16.mxu0 %v253
    %367 = vmatpush1.bf16.msra.mxu0 %v252
    %368 = vmatprep.subr.bf16.mxu0 %v257
    %369 = vmatpush1.bf16.msra.mxu0 %v256
    %370 = vmatprep.subr.bf16.mxu0 %v261
    %371 = vmatpush1.bf16.msra.mxu0 %v260
    %372 = vmatprep.subr.bf16.mxu0 0
    %373 = vmatpush1.bf16.msra.mxu0 0
    %374 = vmatprep.subr.bf16.mxu0 0
    %375 = vmatpush1.bf16.msra.mxu0 0
    %376 = vmatprep.subr.bf16.mxu0 0
    %377 = vmatpush1.bf16.msra.mxu0 0
    %378 = vmatprep.subr.bf16.mxu0 0
    %379 = vmatpush1.bf16.msra.mxu0 0
    %380 = vmatprep.subr.bf16.mxu0 0
    %381 = vmatpush1.bf16.msra.mxu0 0
    %382 = vmatprep.subr.bf16.mxu0 0
    %383 = vmatpush1.bf16.msra.mxu0 0
    %384 = vmatprep.subr.bf16.mxu0 0
    %385 = vmatpush1.bf16.msra.mxu0 0
    %386 = vmatprep.subr.bf16.mxu0 0
    %387 = vmatpush1.bf16.msra.mxu0 0
    %388 = vmatprep.mubr.bf16.mxu0 0
    %389 = vmatmul.mubr.bf16.gmra.mrb[0].mxu0 0
    %v390 = vpop.f32.mrb[0].mxu0
    %v391 = vadd.f32 %v306, %v390
    %v392 = vpop.f32.mrb[0].mxu0
    %v393 = vadd.f32 %v310, %v392
    %v394 = vpop.f32.mrb[0].mxu0
    %v395 = vpop.f32.mrb[0].mxu0
    %396 = vdwg.mxu0
    %v397 = vtanh.pop %v350
    %v398 = vtanh.pop %v352
    %v399 = vtanh.pop %v391
    %v400 = vtanh.pop %v393
    %v401 = vmul.f32 %v397, 0.5
    %v402 = vmul.f32 %v398, 0.5
    %v403 = vmul.f32 %v399, 0.5
    %v404 = vadd.f32 %v401, 0.5
    %v405 = vadd.f32 %v402, 0.5
    %v406 = vadd.f32 %v403, 0.5
    %v407 = vmul.f32 %v405, 0.0
    %v408 = vmul.f32 %v404, %v400
    %v409 = vadd.f32 %v407, %v408
    %v410 = vtanh.pop %v409
    %v411 = vmul.f32 %v406, %v410
    %v412 = vpack.c.bf16 %v411, %v411
    %s413 = scalar_lea.vmem [#allocation2], 1
    %v414 = vld [vmem:[%s413] ss:$8 sm:$0xf]
    %v416 = vlaneseq
    %v417 = vshrl.u32 %v416, 7
    %v418 = vsub.s32 0, %v417
    %v419 = vrot.slane %v414, %v418
    %v420 = vlaneseq
    %v421 = vshrl.u32 %v420, 7
    %v422 = vsub.s32 1, %v421
    %v423 = vrot.slane %v414, %v422
    %v424 = vlaneseq
    %v425 = vshrl.u32 %v424, 7
    %v426 = vsub.s32 2, %v425
    %v427 = vrot.slane %v414, %v426
    %v428 = vlaneseq
    %v429 = vshrl.u32 %v428, 7
    %v430 = vsub.s32 3, %v429
    %v431 = vrot.slane %v414, %v430
    %436 = vmatprep.subr.bf16.mxu0 %v231
    %437 = vmatpush1.bf16.msra.mxu0 %v230
    %438 = vmatprep.subr.bf16.mxu0 %v235
    %439 = vmatpush1.bf16.msra.mxu0 %v234
    %440 = vmatprep.subr.bf16.mxu0 %v239
    %441 = vmatpush1.bf16.msra.mxu0 %v238
    %442 = vmatprep.subr.bf16.mxu0 %v243
    %443 = vmatpush1.bf16.msra.mxu0 %v242
    %444 = vmatprep.subr.bf16.mxu0 %v247
    %445 = vmatpush1.bf16.msra.mxu0 %v246
    %446 = vmatprep.subr.bf16.mxu0 %v251
    %447 = vmatpush1.bf16.msra.mxu0 %v250
    %448 = vmatprep.subr.bf16.mxu0 %v255
    %449 = vmatpush1.bf16.msra.mxu0 %v254
    %450 = vmatprep.subr.bf16.mxu0 %v259
    %451 = vmatpush1.bf16.msra.mxu0 %v258
    %452 = vmatprep.subr.bf16.mxu0 0
    %453 = vmatpush1.bf16.msra.mxu0 0
    %454 = vmatprep.subr.bf16.mxu0 0
    %455 = vmatpush1.bf16.msra.mxu0 0
    %456 = vmatprep.subr.bf16.mxu0 0
    %457 = vmatpush1.bf16.msra.mxu0 0
    %458 = vmatprep.subr.bf16.mxu0 0
    %459 = vmatpush1.bf16.msra.mxu0 0
    %460 = vmatprep.subr.bf16.mxu0 0
    %461 = vmatpush1.bf16.msra.mxu0 0
    %462 = vmatprep.subr.bf16.mxu0 0
    %463 = vmatpush1.bf16.msra.mxu0 0
    %464 = vmatprep.subr.bf16.mxu0 0
    %465 = vmatpush1.bf16.msra.mxu0 0
    %466 = vmatprep.subr.bf16.mxu0 0
    %467 = vmatpush1.bf16.msra.mxu0 0
    %468 = vmatprep.mubr.bf16.mxu0 0
    %469 = vmatmul.mubr.bf16.gmra.mrb[0].mxu0 %v412
    %v470 = vpop.f32.mrb[0].mxu0
    %v471 = vadd.f32 %v419, %v470
    %v472 = vpop.f32.mrb[0].mxu0
    %v473 = vadd.f32 %v423, %v472
    %v474 = vpop.f32.mrb[0].mxu0
    %v475 = vpop.f32.mrb[0].mxu0
    %476 = vdwg.mxu0
    %477 = vmatprep.subr.bf16.mxu0 %v233
    %478 = vmatpush1.bf16.msra.mxu0 %v232
    %479 = vmatprep.subr.bf16.mxu0 %v237
    %480 = vmatpush1.bf16.msra.mxu0 %v236
    %481 = vmatprep.subr.bf16.mxu0 %v241
    %482 = vmatpush1.bf16.msra.mxu0 %v240
    %483 = vmatprep.subr.bf16.mxu0 %v245
    %484 = vmatpush1.bf16.msra.mxu0 %v244
    %485 = vmatprep.subr.bf16.mxu0 %v249
    %486 = vmatpush1.bf16.msra.mxu0 %v248
    %487 = vmatprep.subr.bf16.mxu0 %v253
    %488 = vmatpush1.bf16.msra.mxu0 %v252
    %489 = vmatprep.subr.bf16.mxu0 %v257
    %490 = vmatpush1.bf16.msra.mxu0 %v256
    %491 = vmatprep.subr.bf16.mxu0 %v261
    %492 = vmatpush1.bf16.msra.mxu0 %v260
    %493 = vmatprep.subr.bf16.mxu0 0
    %494 = vmatpush1.bf16.msra.mxu0 0
    %495 = vmatprep.subr.bf16.mxu0 0
    %496 = vmatpush1.bf16.msra.mxu0 0
    %497 = vmatprep.subr.bf16.mxu0 0
    %498 = vmatpush1.bf16.msra.mxu0 0
    %499 = vmatprep.subr.bf16.mxu0 0
    %500 = vmatpush1.bf16.msra.mxu0 0
    %501 = vmatprep.subr.bf16.mxu0 0
    %502 = vmatpush1.bf16.msra.mxu0 0
    %503 = vmatprep.subr.bf16.mxu0 0
    %504 = vmatpush1.bf16.msra.mxu0 0
    %505 = vmatprep.subr.bf16.mxu0 0
    %506 = vmatpush1.bf16.msra.mxu0 0
    %507 = vmatprep.subr.bf16.mxu0 0
    %508 = vmatpush1.bf16.msra.mxu0 0
    %509 = vmatprep.mubr.bf16.mxu0 0
    %510 = vmatmul.mubr.bf16.gmra.mrb[0].mxu0 %v412
    %v511 = vpop.f32.mrb[0].mxu0
    %v512 = vadd.f32 %v427, %v511
    %v513 = vpop.f32.mrb[0].mxu0
    %v514 = vadd.f32 %v431, %v513
    %v515 = vpop.f32.mrb[0].mxu0
    %v516 = vpop.f32.mrb[0].mxu0
    %517 = vdwg.mxu0
    %v518 = vtanh.pop %v471
    %v519 = vtanh.pop %v473
    %v520 = vtanh.pop %v512
    %v521 = vtanh.pop %v514
    %v522 = vmul.f32 %v518, 0.5
    %v523 = vmul.f32 %v519, 0.5
    %v524 = vmul.f32 %v520, 0.5
    %v525 = vadd.f32 %v522, 0.5
    %v526 = vadd.f32 %v523, 0.5
    %v527 = vadd.f32 %v524, 0.5
    %v528 = vmul.f32 %v526, %v409
    %v529 = vmul.f32 %v525, %v521
    %v530 = vadd.f32 %v528, %v529
    %v531 = vtanh.pop %v530
    %v532 = vmul.f32 %v527, %v531
    %v533 = vpack.c.bf16 %v532, %v532
    %s534 = scalar_lea.vmem [#allocation2], 2
    %v535 = vld [vmem:[%s534] ss:$8 sm:$0xf]
    %v537 = vlaneseq
    %v538 = vshrl.u32 %v537, 7
    %v539 = vsub.s32 0, %v538
    %v540 = vrot.slane %v535, %v539
    %v541 = vlaneseq
    %v542 = vshrl.u32 %v541, 7
    %v543 = vsub.s32 1, %v542
    %v544 = vrot.slane %v535, %v543
    %v545 = vlaneseq
    %v546 = vshrl.u32 %v545, 7
    %v547 = vsub.s32 2, %v546
    %v548 = vrot.slane %v535, %v547
    %v549 = vlaneseq
    %v550 = vshrl.u32 %v549, 7
    %v551 = vsub.s32 3, %v550
    %v552 = vrot.slane %v535, %v551
    %557 = vmatprep.subr.bf16.mxu0 %v231
    %558 = vmatpush1.bf16.msra.mxu0 %v230
    %559 = vmatprep.subr.bf16.mxu0 %v235
    %560 = vmatpush1.bf16.msra.mxu0 %v234
    %561 = vmatprep.subr.bf16.mxu0 %v239
    %562 = vmatpush1.bf16.msra.mxu0 %v238
    %563 = vmatprep.subr.bf16.mxu0 %v243
    %564 = vmatpush1.bf16.msra.mxu0 %v242
    %565 = vmatprep.subr.bf16.mxu0 %v247
    %566 = vmatpush1.bf16.msra.mxu0 %v246
    %567 = vmatprep.subr.bf16.mxu0 %v251
    %568 = vmatpush1.bf16.msra.mxu0 %v250
    %569 = vmatprep.subr.bf16.mxu0 %v255
    %570 = vmatpush1.bf16.msra.mxu0 %v254
    %571 = vmatprep.subr.bf16.mxu0 %v259
    %572 = vmatpush1.bf16.msra.mxu0 %v258
    %573 = vmatprep.subr.bf16.mxu0 0
    %574 = vmatpush1.bf16.msra.mxu0 0
    %575 = vmatprep.subr.bf16.mxu0 0
    %576 = vmatpush1.bf16.msra.mxu0 0
    %577 = vmatprep.subr.bf16.mxu0 0
    %578 = vmatpush1.bf16.msra.mxu0 0
    %579 = vmatprep.subr.bf16.mxu0 0
    %580 = vmatpush1.bf16.msra.mxu0 0
    %581 = vmatprep.subr.bf16.mxu0 0
    %582 = vmatpush1.bf16.msra.mxu0 0
    %583 = vmatprep.subr.bf16.mxu0 0
    %584 = vmatpush1.bf16.msra.mxu0 0
    %585 = vmatprep.subr.bf16.mxu0 0
    %586 = vmatpush1.bf16.msra.mxu0 0
    %587 = vmatprep.subr.bf16.mxu0 0
    %588 = vmatpush1.bf16.msra.mxu0 0
    %589 = vmatprep.mubr.bf16.mxu0 0
    %590 = vmatmul.mubr.bf16.gmra.mrb[0].mxu0 %v533
    %v591 = vpop.f32.mrb[0].mxu0
    %v592 = vadd.f32 %v540, %v591
    %v593 = vpop.f32.mrb[0].mxu0
    %v594 = vadd.f32 %v544, %v593
    %v595 = vpop.f32.mrb[0].mxu0
    %v596 = vpop.f32.mrb[0].mxu0
    %597 = vdwg.mxu0
    %598 = vmatprep.subr.bf16.mxu0 %v233
    %599 = vmatpush1.bf16.msra.mxu0 %v232
    %600 = vmatprep.subr.bf16.mxu0 %v237
    %601 = vmatpush1.bf16.msra.mxu0 %v236
    %602 = vmatprep.subr.bf16.mxu0 %v241
    %603 = vmatpush1.bf16.msra.mxu0 %v240
    %604 = vmatprep.subr.bf16.mxu0 %v245
    %605 = vmatpush1.bf16.msra.mxu0 %v244
    %606 = vmatprep.subr.bf16.mxu0 %v249
    %607 = vmatpush1.bf16.msra.mxu0 %v248
    %608 = vmatprep.subr.bf16.mxu0 %v253
    %609 = vmatpush1.bf16.msra.mxu0 %v252
    %610 = vmatprep.subr.bf16.mxu0 %v257
    %611 = vmatpush1.bf16.msra.mxu0 %v256
    %612 = vmatprep.subr.bf16.mxu0 %v261
    %613 = vmatpush1.bf16.msra.mxu0 %v260
    %614 = vmatprep.subr.bf16.mxu0 0
    %615 = vmatpush1.bf16.msra.mxu0 0
    %616 = vmatprep.subr.bf16.mxu0 0
    %617 = vmatpush1.bf16.msra.mxu0 0
    %618 = vmatprep.subr.bf16.mxu0 0
    %619 = vmatpush1.bf16.msra.mxu0 0
    %620 = vmatprep.subr.bf16.mxu0 0
    %621 = vmatpush1.bf16.msra.mxu0 0
    %622 = vmatprep.subr.bf16.mxu0 0
    %623 = vmatpush1.bf16.msra.mxu0 0
    %624 = vmatprep.subr.bf16.mxu0 0
    %625 = vmatpush1.bf16.msra.mxu0 0
    %626 = vmatprep.subr.bf16.mxu0 0
    %627 = vmatpush1.bf16.msra.mxu0 0
    %628 = vmatprep.subr.bf16.mxu0 0
    %629 = vmatpush1.bf16.msra.mxu0 0
    %630 = vmatprep.mubr.bf16.mxu0 0
    %631 = vmatmul.mubr.bf16.gmra.mrb[0].mxu0 %v533
    %v632 = vpop.f32.mrb[0].mxu0
    %v633 = vadd.f32 %v548, %v632
    %v634 = vpop.f32.mrb[0].mxu0
    %v635 = vadd.f32 %v552, %v634
    %v636 = vpop.f32.mrb[0].mxu0
    %v637 = vpop.f32.mrb[0].mxu0
    %638 = vdwg.mxu0
    %v639 = vtanh.pop %v592
    %v640 = vtanh.pop %v594
    %v641 = vtanh.pop %v633
    %v642 = vtanh.pop %v635
    %v643 = vmul.f32 %v639, 0.5
    %v644 = vmul.f32 %v640, 0.5
    %v645 = vmul.f32 %v641, 0.5
    %v646 = vadd.f32 %v643, 0.5
    %v647 = vadd.f32 %v644, 0.5
    %v648 = vadd.f32 %v645, 0.5
    %v649 = vmul.f32 %v647, %v530
    %v650 = vmul.f32 %v646, %v642
    %v651 = vadd.f32 %v649, %v650
    %v652 = vtanh.pop %v651
    %v653 = vmul.f32 %v648, %v652
    %v654 = vpack.c.bf16 %v653, %v653
    %s655 = scalar_lea.vmem [#allocation2], 3
    %v656 = vld [vmem:[%s655] ss:$8 sm:$0xf]
    %v658 = vlaneseq
    %v659 = vshrl.u32 %v658, 7
    %v660 = vsub.s32 0, %v659
    %v661 = vrot.slane %v656, %v660
    %v662 = vlaneseq
    %v663 = vshrl.u32 %v662, 7
    %v664 = vsub.s32 1, %v663
    %v665 = vrot.slane %v656, %v664
    %v666 = vlaneseq
    %v667 = vshrl.u32 %v666, 7
    %v668 = vsub.s32 2, %v667
    %v669 = vrot.slane %v656, %v668
    %v670 = vlaneseq
    %v671 = vshrl.u32 %v670, 7
    %v672 = vsub.s32 3, %v671
    %v673 = vrot.slane %v656, %v672
    %678 = vmatprep.subr.bf16.mxu0 %v231
    %679 = vmatpush1.bf16.msra.mxu0 %v230
    %680 = vmatprep.subr.bf16.mxu0 %v235
    %681 = vmatpush1.bf16.msra.mxu0 %v234
    %682 = vmatprep.subr.bf16.mxu0 %v239
    %683 = vmatpush1.bf16.msra.mxu0 %v238
    %684 = vmatprep.subr.bf16.mxu0 %v243
    %685 = vmatpush1.bf16.msra.mxu0 %v242
    %686 = vmatprep.subr.bf16.mxu0 %v247
    %687 = vmatpush1.bf16.msra.mxu0 %v246
    %688 = vmatprep.subr.bf16.mxu0 %v251
    %689 = vmatpush1.bf16.msra.mxu0 %v250
    %690 = vmatprep.subr.bf16.mxu0 %v255
    %691 = vmatpush1.bf16.msra.mxu0 %v254
    %692 = vmatprep.subr.bf16.mxu0 %v259
    %693 = vmatpush1.bf16.msra.mxu0 %v258
    %694 = vmatprep.subr.bf16.mxu0 0
    %695 = vmatpush1.bf16.msra.mxu0 0
    %696 = vmatprep.subr.bf16.mxu0 0
    %697 = vmatpush1.bf16.msra.mxu0 0
    %698 = vmatprep.subr.bf16.mxu0 0
    %699 = vmatpush1.bf16.msra.mxu0 0
    %700 = vmatprep.subr.bf16.mxu0 0
    %701 = vmatpush1.bf16.msra.mxu0 0
    %702 = vmatprep.subr.bf16.mxu0 0
    %703 = vmatpush1.bf16.msra.mxu0 0
    %704 = vmatprep.subr.bf16.mxu0 0
    %705 = vmatpush1.bf16.msra.mxu0 0
    %706 = vmatprep.subr.bf16.mxu0 0
    %707 = vmatpush1.bf16.msra.mxu0 0
    %708 = vmatprep.subr.bf16.mxu0 0
    %709 = vmatpush1.bf16.msra.mxu0 0
    %710 = vmatprep.mubr.bf16.mxu0 0
    %711 = vmatmul.mubr.bf16.gmra.mrb[0].mxu0 %v654
    %v712 = vpop.f32.mrb[0].mxu0
    %v713 = vadd.f32 %v661, %v712
    %v714 = vpop.f32.mrb[0].mxu0
    %v715 = vadd.f32 %v665, %v714
    %v716 = vpop.f32.mrb[0].mxu0
    %v717 = vpop.f32.mrb[0].mxu0
    %718 = vdwg.mxu0
    %719 = vmatprep.subr.bf16.mxu0 %v233
    %720 = vmatpush1.bf16.msra.mxu0 %v232
    %721 = vmatprep.subr.bf16.mxu0 %v237
    %722 = vmatpush1.bf16.msra.mxu0 %v236
    %723 = vmatprep.subr.bf16.mxu0 %v241
    %724 = vmatpush1.bf16.msra.mxu0 %v240
    %725 = vmatprep.subr.bf16.mxu0 %v245
    %726 = vmatpush1.bf16.msra.mxu0 %v244
    %727 = vmatprep.subr.bf16.mxu0 %v249
    %728 = vmatpush1.bf16.msra.mxu0 %v248
    %729 = vmatprep.subr.bf16.mxu0 %v253
    %730 = vmatpush1.bf16.msra.mxu0 %v252
    %731 = vmatprep.subr.bf16.mxu0 %v257
    %732 = vmatpush1.bf16.msra.mxu0 %v256
    %733 = vmatprep.subr.bf16.mxu0 %v261
    %734 = vmatpush1.bf16.msra.mxu0 %v260
    %735 = vmatprep.subr.bf16.mxu0 0
    %736 = vmatpush1.bf16.msra.mxu0 0
    %737 = vmatprep.subr.bf16.mxu0 0
    %738 = vmatpush1.bf16.msra.mxu0 0
    %739 = vmatprep.subr.bf16.mxu0 0
    %740 = vmatpush1.bf16.msra.mxu0 0
    %741 = vmatprep.subr.bf16.mxu0 0
    %742 = vmatpush1.bf16.msra.mxu0 0
    %743 = vmatprep.subr.bf16.mxu0 0
    %744 = vmatpush1.bf16.msra.mxu0 0
    %745 = vmatprep.subr.bf16.mxu0 0
    %746 = vmatpush1.bf16.msra.mxu0 0
    %747 = vmatprep.subr.bf16.mxu0 0
    %748 = vmatpush1.bf16.msra.mxu0 0
    %749 = vmatprep.subr.bf16.mxu0 0
    %750 = vmatpush1.bf16.msra.mxu0 0
    %751 = vmatprep.mubr.bf16.mxu0 0
    %752 = vmatmul.mubr.bf16.gmra.mrb[0].mxu0 %v654
    %v753 = vpop.f32.mrb[0].mxu0
    %v754 = vadd.f32 %v669, %v753
    %v755 = vpop.f32.mrb[0].mxu0
    %v756 = vadd.f32 %v673, %v755
    %v757 = vpop.f32.mrb[0].mxu0
    %v758 = vpop.f32.mrb[0].mxu0
    %759 = vdwg.mxu0
    %v760 = vtanh.pop %v713
    %v761 = vtanh.pop %v715
    %v762 = vtanh.pop %v754
    %v763 = vtanh.pop %v756
    %v764 = vmul.f32 %v760, 0.5
    %v765 = vmul.f32 %v761, 0.5
    %v766 = vmul.f32 %v762, 0.5
    %v767 = vadd.f32 %v764, 0.5
    %v768 = vadd.f32 %v765, 0.5
    %v769 = vadd.f32 %v766, 0.5
    %v770 = vmul.f32 %v768, %v651
    %v771 = vmul.f32 %v767, %v763
    %v772 = vadd.f32 %v770, %v771
    %v773 = vtanh.pop %v772
    %v774 = vmul.f32 %v769, %v773
    %v775 = vpack.c.bf16 %v774, %v774
    %s776 = scalar_lea.vmem [#allocation2], 4
    %v777 = vld [vmem:[%s776] ss:$8 sm:$0xf]
    %v779 = vlaneseq
    %v780 = vshrl.u32 %v779, 7
    %v781 = vsub.s32 0, %v780
    %v782 = vrot.slane %v777, %v781
    %v783 = vlaneseq
    %v784 = vshrl.u32 %v783, 7
    %v785 = vsub.s32 1, %v784
    %v786 = vrot.slane %v777, %v785
    %v787 = vlaneseq
    %v788 = vshrl.u32 %v787, 7
    %v789 = vsub.s32 2, %v788
    %v790 = vrot.slane %v777, %v789
    %v791 = vlaneseq
    %v792 = vshrl.u32 %v791, 7
    %v793 = vsub.s32 3, %v792
    %v794 = vrot.slane %v777, %v793
    %799 = vmatprep.subr.bf16.mxu0 %v231
    %800 = vmatpush1.bf16.msra.mxu0 %v230
    %801 = vmatprep.subr.bf16.mxu0 %v235
    %802 = vmatpush1.bf16.msra.mxu0 %v234
    %803 = vmatprep.subr.bf16.mxu0 %v239
    %804 = vmatpush1.bf16.msra.mxu0 %v238
    %805 = vmatprep.subr.bf16.mxu0 %v243
    %806 = vmatpush1.bf16.msra.mxu0 %v242
    %807 = vmatprep.subr.bf16.mxu0 %v247
    %808 = vmatpush1.bf16.msra.mxu0 %v246
    %809 = vmatprep.subr.bf16.mxu0 %v251
    %810 = vmatpush1.bf16.msra.mxu0 %v250
    %811 = vmatprep.subr.bf16.mxu0 %v255
    %812 = vmatpush1.bf16.msra.mxu0 %v254
    %813 = vmatprep.subr.bf16.mxu0 %v259
    %814 = vmatpush1.bf16.msra.mxu0 %v258
    %815 = vmatprep.subr.bf16.mxu0 0
    %816 = vmatpush1.bf16.msra.mxu0 0
    %817 = vmatprep.subr.bf16.mxu0 0
    %818 = vmatpush1.bf16.msra.mxu0 0
    %819 = vmatprep.subr.bf16.mxu0 0
    %820 = vmatpush1.bf16.msra.mxu0 0
    %821 = vmatprep.subr.bf16.mxu0 0
    %822 = vmatpush1.bf16.msra.mxu0 0
    %823 = vmatprep.subr.bf16.mxu0 0
    %824 = vmatpush1.bf16.msra.mxu0 0
    %825 = vmatprep.subr.bf16.mxu0 0
    %826 = vmatpush1.bf16.msra.mxu0 0
    %827 = vmatprep.subr.bf16.mxu0 0
    %828 = vmatpush1.bf16.msra.mxu0 0
    %829 = vmatprep.subr.bf16.mxu0 0
    %830 = vmatpush1.bf16.msra.mxu0 0
    %831 = vmatprep.mubr.bf16.mxu0 0
    %832 = vmatmul.mubr.bf16.gmra.mrb[0].mxu0 %v775
    %v833 = vpop.f32.mrb[0].mxu0
    %v834 = vadd.f32 %v782, %v833
    %v835 = vpop.f32.mrb[0].mxu0
    %v836 = vadd.f32 %v786, %v835
    %v837 = vpop.f32.mrb[0].mxu0
    %v838 = vpop.f32.mrb[0].mxu0
    %839 = vdwg.mxu0
    %840 = vmatprep.subr.bf16.mxu0 %v233
    %841 = vmatpush1.bf16.msra.mxu0 %v232
    %842 = vmatprep.subr.bf16.mxu0 %v237
    %843 = vmatpush1.bf16.msra.mxu0 %v236
    %844 = vmatprep.subr.bf16.mxu0 %v241
    %845 = vmatpush1.bf16.msra.mxu0 %v240
    %846 = vmatprep.subr.bf16.mxu0 %v245
    %847 = vmatpush1.bf16.msra.mxu0 %v244
    %848 = vmatprep.subr.bf16.mxu0 %v249
    %849 = vmatpush1.bf16.msra.mxu0 %v248
    %850 = vmatprep.subr.bf16.mxu0 %v253
    %851 = vmatpush1.bf16.msra.mxu0 %v252
    %852 = vmatprep.subr.bf16.mxu0 %v257
    %853 = vmatpush1.bf16.msra.mxu0 %v256
    %854 = vmatprep.subr.bf16.mxu0 %v261
    %855 = vmatpush1.bf16.msra.mxu0 %v260
    %856 = vmatprep.subr.bf16.mxu0 0
    %857 = vmatpush1.bf16.msra.mxu0 0
    %858 = vmatprep.subr.bf16.mxu0 0
    %859 = vmatpush1.bf16.msra.mxu0 0
    %860 = vmatprep.subr.bf16.mxu0 0
    %861 = vmatpush1.bf16.msra.mxu0 0
    %862 = vmatprep.subr.bf16.mxu0 0
    %863 = vmatpush1.bf16.msra.mxu0 0
    %864 = vmatprep.subr.bf16.mxu0 0
    %865 = vmatpush1.bf16.msra.mxu0 0
    %866 = vmatprep.subr.bf16.mxu0 0
    %867 = vmatpush1.bf16.msra.mxu0 0
    %868 = vmatprep.subr.bf16.mxu0 0
    %869 = vmatpush1.bf16.msra.mxu0 0
    %870 = vmatprep.subr.bf16.mxu0 0
    %871 = vmatpush1.bf16.msra.mxu0 0
    %872 = vmatprep.mubr.bf16.mxu0 0
    %873 = vmatmul.mubr.bf16.gmra.mrb[0].mxu0 %v775
    %v874 = vpop.f32.mrb[0].mxu0
    %v875 = vadd.f32 %v790, %v874
    %v876 = vpop.f32.mrb[0].mxu0
    %v877 = vadd.f32 %v794, %v876
    %v878 = vpop.f32.mrb[0].mxu0
    %v879 = vpop.f32.mrb[0].mxu0
    %880 = vdwg.mxu0
    %v881 = vtanh.pop %v834
    %v882 = vtanh.pop %v836
    %v883 = vtanh.pop %v875
    %v884 = vtanh.pop %v877
    %v885 = vmul.f32 %v881, 0.5
    %v886 = vmul.f32 %v882, 0.5
    %v887 = vmul.f32 %v883, 0.5
    %v888 = vadd.f32 %v885, 0.5
    %v889 = vadd.f32 %v886, 0.5
    %v890 = vadd.f32 %v887, 0.5
    %v891 = vmul.f32 %v889, %v772
    %v892 = vmul.f32 %v888, %v884
    %v893 = vadd.f32 %v891, %v892
    %v894 = vtanh.pop %v893
    %v895 = vmul.f32 %v890, %v894
    %v896 = vpack.c.bf16 %v895, %v895
    %s897 = scalar_lea.vmem [#allocation2], 5
    %v898 = vld [vmem:[%s897] ss:$8 sm:$0xf]
    %v900 = vlaneseq
    %v901 = vshrl.u32 %v900, 7
    %v902 = vsub.s32 0, %v901
    %v903 = vrot.slane %v898, %v902
    %v904 = vlaneseq
    %v905 = vshrl.u32 %v904, 7
    %v906 = vsub.s32 1, %v905
    %v907 = vrot.slane %v898, %v906
    %v908 = vlaneseq
    %v909 = vshrl.u32 %v908, 7
    %v910 = vsub.s32 2, %v909
    %v911 = vrot.slane %v898, %v910
    %v912 = vlaneseq
    %v913 = vshrl.u32 %v912, 7
    %v914 = vsub.s32 3, %v913
    %v915 = vrot.slane %v898, %v914
    %920 = vmatprep.subr.bf16.mxu0 %v231
    %921 = vmatpush1.bf16.msra.mxu0 %v230
    %922 = vmatprep.subr.bf16.mxu0 %v235
    %923 = vmatpush1.bf16.msra.mxu0 %v234
    %924 = vmatprep.subr.bf16.mxu0 %v239
    %925 = vmatpush1.bf16.msra.mxu0 %v238
    %926 = vmatprep.subr.bf16.mxu0 %v243
    %927 = vmatpush1.bf16.msra.mxu0 %v242
    %928 = vmatprep.subr.bf16.mxu0 %v247
    %929 = vmatpush1.bf16.msra.mxu0 %v246
    %930 = vmatprep.subr.bf16.mxu0 %v251
    %931 = vmatpush1.bf16.msra.mxu0 %v250
    %932 = vmatprep.subr.bf16.mxu0 %v255
    %933 = vmatpush1.bf16.msra.mxu0 %v254
    %934 = vmatprep.subr.bf16.mxu0 %v259
    %935 = vmatpush1.bf16.msra.mxu0 %v258
    %936 = vmatprep.subr.bf16.mxu0 0
    %937 = vmatpush1.bf16.msra.mxu0 0
    %938 = vmatprep.subr.bf16.mxu0 0
    %939 = vmatpush1.bf16.msra.mxu0 0
    %940 = vmatprep.subr.bf16.mxu0 0
    %941 = vmatpush1.bf16.msra.mxu0 0
    %942 = vmatprep.subr.bf16.mxu0 0
    %943 = vmatpush1.bf16.msra.mxu0 0
    %944 = vmatprep.subr.bf16.mxu0 0
    %945 = vmatpush1.bf16.msra.mxu0 0
    %946 = vmatprep.subr.bf16.mxu0 0
    %947 = vmatpush1.bf16.msra.mxu0 0
    %948 = vmatprep.subr.bf16.mxu0 0
    %949 = vmatpush1.bf16.msra.mxu0 0
    %950 = vmatprep.subr.bf16.mxu0 0
    %951 = vmatpush1.bf16.msra.mxu0 0
    %952 = vmatprep.mubr.bf16.mxu0 0
    %953 = vmatmul.mubr.bf16.gmra.mrb[0].mxu0 %v896
    %v954 = vpop.f32.mrb[0].mxu0
    %v955 = vadd.f32 %v903, %v954
    %v956 = vpop.f32.mrb[0].mxu0
    %v957 = vadd.f32 %v907, %v956
    %v958 = vpop.f32.mrb[0].mxu0
    %v959 = vpop.f32.mrb[0].mxu0
    %960 = vdwg.mxu0
    %961 = vmatprep.subr.bf16.mxu0 %v233
    %962 = vmatpush1.bf16.msra.mxu0 %v232
    %963 = vmatprep.subr.bf16.mxu0 %v237
    %964 = vmatpush1.bf16.msra.mxu0 %v236
    %965 = vmatprep.subr.bf16.mxu0 %v241
    %966 = vmatpush1.bf16.msra.mxu0 %v240
    %967 = vmatprep.subr.bf16.mxu0 %v245
    %968 = vmatpush1.bf16.msra.mxu0 %v244
    %969 = vmatprep.subr.bf16.mxu0 %v249
    %970 = vmatpush1.bf16.msra.mxu0 %v248
    %971 = vmatprep.subr.bf16.mxu0 %v253
    %972 = vmatpush1.bf16.msra.mxu0 %v252
    %973 = vmatprep.subr.bf16.mxu0 %v257
    %974 = vmatpush1.bf16.msra.mxu0 %v256
    %975 = vmatprep.subr.bf16.mxu0 %v261
    %976 = vmatpush1.bf16.msra.mxu0 %v260
    %977 = vmatprep.subr.bf16.mxu0 0
    %978 = vmatpush1.bf16.msra.mxu0 0
    %979 = vmatprep.subr.bf16.mxu0 0
    %980 = vmatpush1.bf16.msra.mxu0 0
    %981 = vmatprep.subr.bf16.mxu0 0
    %982 = vmatpush1.bf16.msra.mxu0 0
    %983 = vmatprep.subr.bf16.mxu0 0
    %984 = vmatpush1.bf16.msra.mxu0 0
    %985 = vmatprep.subr.bf16.mxu0 0
    %986 = vmatpush1.bf16.msra.mxu0 0
    %987 = vmatprep.subr.bf16.mxu0 0
    %988 = vmatpush1.bf16.msra.mxu0 0
    %989 = vmatprep.subr.bf16.mxu0 0
    %990 = vmatpush1.bf16.msra.mxu0 0
    %991 = vmatprep.subr.bf16.mxu0 0
    %992 = vmatpush1.bf16.msra.mxu0 0
    %993 = vmatprep.mubr.bf16.mxu0 0
    %994 = vmatmul.mubr.bf16.gmra.mrb[0].mxu0 %v896
    %v995 = vpop.f32.mrb[0].mxu0
    %v996 = vadd.f32 %v911, %v995
    %v997 = vpop.f32.mrb[0].mxu0
    %v998 = vadd.f32 %v915, %v997
    %v999 = vpop.f32.mrb[0].mxu0
    %v1000 = vpop.f32.mrb[0].mxu0
    %1001 = vdwg.mxu0
    %v1002 = vtanh.pop %v955
    %v1003 = vtanh.pop %v957
    %v1004 = vtanh.pop %v996
    %v1005 = vtanh.pop %v998
    %v1006 = vmul.f32 %v1002, 0.5
    %v1007 = vmul.f32 %v1003, 0.5
    %v1008 = vmul.f32 %v1004, 0.5
    %v1009 = vadd.f32 %v1006, 0.5
    %v1010 = vadd.f32 %v1007, 0.5
    %v1011 = vadd.f32 %v1008, 0.5
    %v1012 = vmul.f32 %v1010, %v893
    %v1013 = vmul.f32 %v1009, %v1005
    %v1014 = vadd.f32 %v1012, %v1013
    %v1015 = vtanh.pop %v1014
    %v1016 = vmul.f32 %v1011, %v1015
    %v1017 = vpack.c.bf16 %v1016, %v1016
    %s1018 = scalar_lea.vmem [#allocation2], 6
    %v1019 = vld [vmem:[%s1018] ss:$8 sm:$0xf]
    %v1021 = vlaneseq
    %v1022 = vshrl.u32 %v1021, 7
    %v1023 = vsub.s32 0, %v1022
    %v1024 = vrot.slane %v1019, %v1023
    %v1025 = vlaneseq
    %v1026 = vshrl.u32 %v1025, 7
    %v1027 = vsub.s32 1, %v1026
    %v1028 = vrot.slane %v1019, %v1027
    %v1029 = vlaneseq
    %v1030 = vshrl.u32 %v1029, 7
    %v1031 = vsub.s32 2, %v1030
    %v1032 = vrot.slane %v1019, %v1031
    %v1033 = vlaneseq
    %v1034 = vshrl.u32 %v1033, 7
    %v1035 = vsub.s32 3, %v1034
    %v1036 = vrot.slane %v1019, %v1035
    %1041 = vmatprep.subr.bf16.mxu0 %v231
    %1042 = vmatpush1.bf16.msra.mxu0 %v230
    %1043 = vmatprep.subr.bf16.mxu0 %v235
    %1044 = vmatpush1.bf16.msra.mxu0 %v234
    %1045 = vmatprep.subr.bf16.mxu0 %v239
    %1046 = vmatpush1.bf16.msra.mxu0 %v238
    %1047 = vmatprep.subr.bf16.mxu0 %v243
    %1048 = vmatpush1.bf16.msra.mxu0 %v242
    %1049 = vmatprep.subr.bf16.mxu0 %v247
    %1050 = vmatpush1.bf16.msra.mxu0 %v246
    %1051 = vmatprep.subr.bf16.mxu0 %v251
    %1052 = vmatpush1.bf16.msra.mxu0 %v250
    %1053 = vmatprep.subr.bf16.mxu0 %v255
    %1054 = vmatpush1.bf16.msra.mxu0 %v254
    %1055 = vmatprep.subr.bf16.mxu0 %v259
    %1056 = vmatpush1.bf16.msra.mxu0 %v258
    %1057 = vmatprep.subr.bf16.mxu0 0
    %1058 = vmatpush1.bf16.msra.mxu0 0
    %1059 = vmatprep.subr.bf16.mxu0 0
    %1060 = vmatpush1.bf16.msra.mxu0 0
    %1061 = vmatprep.subr.bf16.mxu0 0
    %1062 = vmatpush1.bf16.msra.mxu0 0
    %1063 = vmatprep.subr.bf16.mxu0 0
    %1064 = vmatpush1.bf16.msra.mxu0 0
    %1065 = vmatprep.subr.bf16.mxu0 0
    %1066 = vmatpush1.bf16.msra.mxu0 0
    %1067 = vmatprep.subr.bf16.mxu0 0
    %1068 = vmatpush1.bf16.msra.mxu0 0
    %1069 = vmatprep.subr.bf16.mxu0 0
    %1070 = vmatpush1.bf16.msra.mxu0 0
    %1071 = vmatprep.subr.bf16.mxu0 0
    %1072 = vmatpush1.bf16.msra.mxu0 0
    %1073 = vmatprep.mubr.bf16.mxu0 0
    %1074 = vmatmul.mubr.bf16.gmra.mrb[0].mxu0 %v1017
    %v1075 = vpop.f32.mrb[0].mxu0
    %v1076 = vadd.f32 %v1024, %v1075
    %v1077 = vpop.f32.mrb[0].mxu0
    %v1078 = vadd.f32 %v1028, %v1077
    %v1079 = vpop.f32.mrb[0].mxu0
    %v1080 = vpop.f32.mrb[0].mxu0
    %1081 = vdwg.mxu0
    %1082 = vmatprep.subr.bf16.mxu0 %v233
    %1083 = vmatpush1.bf16.msra.mxu0 %v232
    %1084 = vmatprep.subr.bf16.mxu0 %v237
    %1085 = vmatpush1.bf16.msra.mxu0 %v236
    %1086 = vmatprep.subr.bf16.mxu0 %v241
    %1087 = vmatpush1.bf16.msra.mxu0 %v240
    %1088 = vmatprep.subr.bf16.mxu0 %v245
    %1089 = vmatpush1.bf16.msra.mxu0 %v244
    %1090 = vmatprep.subr.bf16.mxu0 %v249
    %1091 = vmatpush1.bf16.msra.mxu0 %v248
    %1092 = vmatprep.subr.bf16.mxu0 %v253
    %1093 = vmatpush1.bf16.msra.mxu0 %v252
    %1094 = vmatprep.subr.bf16.mxu0 %v257
    %1095 = vmatpush1.bf16.msra.mxu0 %v256
    %1096 = vmatprep.subr.bf16.mxu0 %v261
    %1097 = vmatpush1.bf16.msra.mxu0 %v260
    %1098 = vmatprep.subr.bf16.mxu0 0
    %1099 = vmatpush1.bf16.msra.mxu0 0
    %1100 = vmatprep.subr.bf16.mxu0 0
    %1101 = vmatpush1.bf16.msra.mxu0 0
    %1102 = vmatprep.subr.bf16.mxu0 0
    %1103 = vmatpush1.bf16.msra.mxu0 0
    %1104 = vmatprep.subr.bf16.mxu0 0
    %1105 = vmatpush1.bf16.msra.mxu0 0
    %1106 = vmatprep.subr.bf16.mxu0 0
    %1107 = vmatpush1.bf16.msra.mxu0 0
    %1108 = vmatprep.subr.bf16.mxu0 0
    %1109 = vmatpush1.bf16.msra.mxu0 0
    %1110 = vmatprep.subr.bf16.mxu0 0
    %1111 = vmatpush1.bf16.msra.mxu0 0
    %1112 = vmatprep.subr.bf16.mxu0 0
    %1113 = vmatpush1.bf16.msra.mxu0 0
    %1114 = vmatprep.mubr.bf16.mxu0 0
    %1115 = vmatmul.mubr.bf16.gmra.mrb[0].mxu0 %v1017
    %v1116 = vpop.f32.mrb[0].mxu0
    %v1117 = vadd.f32 %v1032, %v1116
    %v1118 = vpop.f32.mrb[0].mxu0
    %v1119 = vadd.f32 %v1036, %v1118
    %v1120 = vpop.f32.mrb[0].mxu0
    %v1121 = vpop.f32.mrb[0].mxu0
    %1122 = vdwg.mxu0
    %v1123 = vtanh.pop %v1076
    %v1124 = vtanh.pop %v1078
    %v1125 = vtanh.pop %v1117
    %v1126 = vtanh.pop %v1119
    %v1127 = vmul.f32 %v1123, 0.5
    %v1128 = vmul.f32 %v1124, 0.5
    %v1129 = vmul.f32 %v1125, 0.5
    %v1130 = vadd.f32 %v1127, 0.5
    %v1131 = vadd.f32 %v1128, 0.5
    %v1132 = vadd.f32 %v1129, 0.5
    %v1133 = vmul.f32 %v1131, %v1014
    %v1134 = vmul.f32 %v1130, %v1126
    %v1135 = vadd.f32 %v1133, %v1134
    %v1136 = vtanh.pop %v1135
    %v1137 = vmul.f32 %v1132, %v1136
    %v1138 = vpack.c.bf16 %v1137, %v1137
    %s1139 = scalar_lea.vmem [#allocation2], 7
    %v1140 = vld [vmem:[%s1139] ss:$8 sm:$0xf]
    %v1142 = vlaneseq
    %v1143 = vshrl.u32 %v1142, 7
    %v1144 = vsub.s32 0, %v1143
    %v1145 = vrot.slane %v1140, %v1144
    %v1146 = vlaneseq
    %v1147 = vshrl.u32 %v1146, 7
    %v1148 = vsub.s32 1, %v1147
    %v1149 = vrot.slane %v1140, %v1148
    %v1150 = vlaneseq
    %v1151 = vshrl.u32 %v1150, 7
    %v1152 = vsub.s32 2, %v1151
    %v1153 = vrot.slane %v1140, %v1152
    %v1154 = vlaneseq
    %v1155 = vshrl.u32 %v1154, 7
    %v1156 = vsub.s32 3, %v1155
    %v1157 = vrot.slane %v1140, %v1156
    %1162 = vmatprep.subr.bf16.mxu0 %v231
    %1163 = vmatpush1.bf16.msra.mxu0 %v230
    %1164 = vmatprep.subr.bf16.mxu0 %v235
    %1165 = vmatpush1.bf16.msra.mxu0 %v234
    %1166 = vmatprep.subr.bf16.mxu0 %v239
    %1167 = vmatpush1.bf16.msra.mxu0 %v238
    %1168 = vmatprep.subr.bf16.mxu0 %v243
    %1169 = vmatpush1.bf16.msra.mxu0 %v242
    %1170 = vmatprep.subr.bf16.mxu0 %v247
    %1171 = vmatpush1.bf16.msra.mxu0 %v246
    %1172 = vmatprep.subr.bf16.mxu0 %v251
    %1173 = vmatpush1.bf16.msra.mxu0 %v250
    %1174 = vmatprep.subr.bf16.mxu0 %v255
    %1175 = vmatpush1.bf16.msra.mxu0 %v254
    %1176 = vmatprep.subr.bf16.mxu0 %v259
    %1177 = vmatpush1.bf16.msra.mxu0 %v258
    %1178 = vmatprep.subr.bf16.mxu0 0
    %1179 = vmatpush1.bf16.msra.mxu0 0
    %1180 = vmatprep.subr.bf16.mxu0 0
    %1181 = vmatpush1.bf16.msra.mxu0 0
    %1182 = vmatprep.subr.bf16.mxu0 0
    %1183 = vmatpush1.bf16.msra.mxu0 0
    %1184 = vmatprep.subr.bf16.mxu0 0
    %1185 = vmatpush1.bf16.msra.mxu0 0
    %1186 = vmatprep.subr.bf16.mxu0 0
    %1187 = vmatpush1.bf16.msra.mxu0 0
    %1188 = vmatprep.subr.bf16.mxu0 0
    %1189 = vmatpush1.bf16.msra.mxu0 0
    %1190 = vmatprep.subr.bf16.mxu0 0
    %1191 = vmatpush1.bf16.msra.mxu0 0
    %1192 = vmatprep.subr.bf16.mxu0 0
    %1193 = vmatpush1.bf16.msra.mxu0 0
    %1194 = vmatprep.mubr.bf16.mxu0 0
    %1195 = vmatmul.mubr.bf16.gmra.mrb[0].mxu0 %v1138
    %v1196 = vpop.f32.mrb[0].mxu0
    %v1197 = vadd.f32 %v1145, %v1196
    %v1198 = vpop.f32.mrb[0].mxu0
    %v1199 = vadd.f32 %v1149, %v1198
    %v1200 = vpop.f32.mrb[0].mxu0
    %v1201 = vpop.f32.mrb[0].mxu0
    %1202 = vdwg.mxu0
    %1203 = vmatprep.subr.bf16.mxu0 %v233
    %1204 = vmatpush1.bf16.msra.mxu0 %v232
    %1205 = vmatprep.subr.bf16.mxu0 %v237
    %1206 = vmatpush1.bf16.msra.mxu0 %v236
    %1207 = vmatprep.subr.bf16.mxu0 %v241
    %1208 = vmatpush1.bf16.msra.mxu0 %v240
    %1209 = vmatprep.subr.bf16.mxu0 %v245
    %1210 = vmatpush1.bf16.msra.mxu0 %v244
    %1211 = vmatprep.subr.bf16.mxu0 %v249
    %1212 = vmatpush1.bf16.msra.mxu0 %v248
    %1213 = vmatprep.subr.bf16.mxu0 %v253
    %1214 = vmatpush1.bf16.msra.mxu0 %v252
    %1215 = vmatprep.subr.bf16.mxu0 %v257
    %1216 = vmatpush1.bf16.msra.mxu0 %v256
    %1217 = vmatprep.subr.bf16.mxu0 %v261
    %1218 = vmatpush1.bf16.msra.mxu0 %v260
    %1219 = vmatprep.subr.bf16.mxu0 0
    %1220 = vmatpush1.bf16.msra.mxu0 0
    %1221 = vmatprep.subr.bf16.mxu0 0
    %1222 = vmatpush1.bf16.msra.mxu0 0
    %1223 = vmatprep.subr.bf16.mxu0 0
    %1224 = vmatpush1.bf16.msra.mxu0 0
    %1225 = vmatprep.subr.bf16.mxu0 0
    %1226 = vmatpush1.bf16.msra.mxu0 0
    %1227 = vmatprep.subr.bf16.mxu0 0
    %1228 = vmatpush1.bf16.msra.mxu0 0
    %1229 = vmatprep.subr.bf16.mxu0 0
    %1230 = vmatpush1.bf16.msra.mxu0 0
    %1231 = vmatprep.subr.bf16.mxu0 0
    %1232 = vmatpush1.bf16.msra.mxu0 0
    %1233 = vmatprep.subr.bf16.mxu0 0
    %1234 = vmatpush1.bf16.msra.mxu0 0
    %1235 = vmatprep.mubr.bf16.mxu0 0
    %1236 = vmatmul.mubr.bf16.gmra.mrb[0].mxu0 %v1138
    %v1237 = vpop.f32.mrb[0].mxu0
    %v1238 = vadd.f32 %v1153, %v1237
    %v1239 = vpop.f32.mrb[0].mxu0
    %v1240 = vadd.f32 %v1157, %v1239
    %v1241 = vpop.f32.mrb[0].mxu0
    %v1242 = vpop.f32.mrb[0].mxu0
    %1243 = vdwg.mxu0
    %v1244 = vtanh.pop %v1197
    %v1245 = vtanh.pop %v1199
    %v1246 = vtanh.pop %v1238
    %v1247 = vtanh.pop %v1240
    %v1248 = vmul.f32 %v1244, 0.5
    %v1249 = vmul.f32 %v1245, 0.5
    %v1250 = vmul.f32 %v1246, 0.5
    %v1251 = vadd.f32 %v1248, 0.5
    %v1252 = vadd.f32 %v1249, 0.5
    %v1253 = vadd.f32 %v1250, 0.5
    %v1254 = vmul.f32 %v1252, %v1135
    %v1255 = vmul.f32 %v1251, %v1247
    %v1256 = vadd.f32 %v1254, %v1255
    %v1257 = vtanh.pop %v1256
    %v1258 = vmul.f32 %v1253, %v1257
    %v1259 = vld [vmem:[%s4] sm:$0x1]
    %v1260 = vmul.f32 %v1258, %v1259
    %vm1261 = vcmask 1040384
    %v1262 = vsel %vm1261, %v1260, 0.0
    %1263 = vadd.xlane.f32.xlu0 %v1262
    %v1264 = vpop.xlane.xlu0 %1263
    %v1265 = vld [vmem:[%s5] sm:$0x1]
    %v1266 = vadd.f32 %v1264, %v1265
    %1267 = vst [vmem:[#allocation6] sm:$0x1] %v1266
    // Predicated region
    $region30: #{tpu_custom_call.1} parent=1 // pred_check
      _
    $region31: #{tpu_custom_call.1} parent=1 // pred_check_branch
      %1269 = sbr.rel (0) target = $region33
    $region32: #{tpu_custom_call.1} parent=1 // pred_region
      %s1271 = ssub.s32 16, 16
      %1272 = vsyncadd [#allocation5], %s1271
      %s1274 = sshll.u32 [#allocation6], 4
      %s1275 = int_to_ptr.vmem [resolvable:$true] %s1274
      %1277 = dma.vmem_to_hbm [thread:$0]  %s1275, 16, %s6, [#allocation5]
    $region33: #{tpu_custom_call.1} parent=1 // pred_fallthru
      _
    // Predicated region
    $region34: #{tpu_custom_call.1} parent=1 // pred_check
      _
    $region35: #{tpu_custom_call.1} parent=1 // pred_check_branch
      %1279 = sbr.rel (0) target = $region37
    $region36: #{tpu_custom_call.1} parent=1 // pred_region
      %1280 = dma.done [#allocation5], 16
    $region37: #{tpu_custom_call.1} parent=1 // pred_fallthru
      _
    %1281 = vsyncpa [#allocation4], 1
    %1282 = vsyncpa [#allocation5], 1

</llo_original>
